<compile_context>
chip_gen: v6e
topology: v6e:2x2x1
jax: 0.10.0
libtpu: 0.0.40
codegen_flags: <defaults>
</compile_context>

<pallas_src>
import numpy as np
import jax
import jax.numpy as jnp
from jax.experimental import pallas as pl
from jax.experimental.pallas import tpu as pltpu


# ------------------------------ fused kernel ------------------------------- #

def _decoder_kernel(x_ref, wf_ref, bf_ref, w3_ref, b3_ref, w2_ref, b2_ref,
                    w1_ref, b1_ref, o_ref):
    b = pl.program_id(0)
    xb = x_ref[pl.ds(b, 1), :].astype(jnp.bfloat16)            # (1, latent)

    # ---- FC: produces the 4x4 feature map directly in flattened-NHWC
    #      layout (row = y, col = x*Cin + ch); columns were pre-permuted.
    rows = [jnp.dot(xb, wf_ref[y], preferred_element_type=jnp.float32)
            for y in range(wf_ref.shape[0])]
    h = jnp.concatenate(rows, axis=0) + bf_ref[...]            # (4, 4*4c)

    # ---- ConvTranspose2d(k4,s2,p1) as two row-phase matmuls (K = 2*W*Cin):
    #      out[2*qy+py, ox*Cout+co] =
    #        sum_{ry,ix,ci} xpad[qy+py+ry, ix*Cin+ci] * W[py][(ry*W+ix)*Cin+ci,
    #                                                         ox*Cout+co]
    def convt(h2, w_ref, b_ref, act):
        H, WC = h2.shape
        N = w_ref.shape[-1]                                    # = 2*W*Cout
        z = jnp.zeros((1, WC), jnp.float32)
        hp = jnp.concatenate([z, h2, z], axis=0)               # pad rows by 1
        phases = []
        for py in range(2):
            lhs = jnp.concatenate(
                [hp[py:py + H, :], hp[py + 1:py + 1 + H, :]], axis=1)  # (H,2WC)
            ph = jnp.dot(lhs.astype(jnp.bfloat16), w_ref[py],
                         preferred_element_type=jnp.float32) + b_ref[...]
            phases.append(ph)                                  # (H, N)
        y = jnp.stack(phases, axis=1).reshape(2 * H, N)        # row interleave
        if act == "relu":
            return jnp.maximum(y, 0.0)
        return jax.nn.sigmoid(y)

    h = convt(h, w3_ref, b3_ref, "relu")       # ( 8,  8*2c)
    h = convt(h, w2_ref, b2_ref, "relu")       # (16, 16* c)
    h = convt(h, w1_ref, b1_ref, "sigmoid")    # (32, 32)
    o_ref[0, :, :] = h


# ------------------------------ JAX wrapper -------------------------------- #

def _const_spec(shape):
    zeros = (0,) * len(shape)
    return pl.BlockSpec(shape, lambda b: zeros)


def decoder_forward(prep, x):
    """Full Decoder forward; returns NCHW (B, 1, 32, 32) like PyTorch."""
    B = x.shape[0]
    out = pl.pallas_call(
        _decoder_kernel,
        grid=(B,),
        out_shape=jax.ShapeDtypeStruct((B, 32, 32), jnp.float32),
        in_specs=[
            _const_spec(x.shape),
            _const_spec(prep["wf"].shape), _const_spec(prep["bf"].shape),
            _const_spec(prep["w3"].shape), _const_spec(prep["b3"].shape),
            _const_spec(prep["w2"].shape), _const_spec(prep["b2"].shape),
            _const_spec(prep["w1"].shape), _const_spec(prep["b1"].shape),
        ],
        out_specs=pl.BlockSpec((1, 32, 32), lambda b: (b, 0, 0)),
        compiler_params=pltpu.CompilerParams(
            dimension_semantics=("parallel",)),
    )(x, prep["wf"], prep["bf"], prep["w3"], prep["b3"],
      prep["w2"], prep["b2"], prep["w1"], prep["b1"])
    return out.reshape(B, 1, 32, 32)


# -------------------- one-time weight preparation (hoisted) ----------------- #

def prepare_params(params):
    """Convert PyTorch-layout params into fused-kernel form (runs once)."""
    c = params["c"]

    # FC: torch computes y = x @ W.T + b, output viewed as (ch, y, x).
    # Reorder columns to (y, x, ch) and split per y-row so the kernel gets the
    # 4x4 map directly in flattened-NHWC layout.
    wt = np.asarray(params["fc_w"], np.float32)                 # (4c*16, latent)
    bt = np.asarray(params["fc_b"], np.float32)
    latent = wt.shape[1]
    w_yxc = wt.reshape(4 * c, 4, 4, latent).transpose(1, 2, 0, 3)   # (y,x,ch,k)
    wf = w_yxc.reshape(4, 4 * 4 * c, latent).transpose(0, 2, 1)     # (4,latent,16c)
    bf = bt.reshape(4 * c, 4, 4).transpose(1, 2, 0).reshape(4, 4 * 4 * c)

    # ConvTranspose2d(k4,s2,p1) -> per-row-phase banded matmul weights.
    # ky = 3 - 2*ry - py ; kx = ox + 1 - 2*ix (zero contribution outside [0,4)).
    def convt_mats(w_t, b_t, w_in):
        w_t = np.asarray(w_t, np.float32)                       # (Cin,Cout,4,4)
        b_t = np.asarray(b_t, np.float32)
        cin, cout = w_t.shape[0], w_t.shape[1]
        w_out = 2 * w_in
        mats = np.zeros((2, 2 * w_in * cin, w_out * cout), np.float32)
        for py in range(2):
            for ry in range(2):
                ky = 3 - 2 * ry - py
                for ix in range(w_in):
                    for ox in range(w_out):
                        kx = ox + 1 - 2 * ix
                        if 0 <= kx < 4:
                            r0 = (ry * w_in + ix) * cin
                            c0 = ox * cout
                            mats[py, r0:r0 + cin, c0:c0 + cout] = w_t[:, :, ky, kx]
        bias = np.tile(b_t, w_out).reshape(1, w_out * cout)
        return mats, bias

    w3, b3 = convt_mats(params["w3"], params["b3"], 4)
    w2, b2 = convt_mats(params["w2"], params["b2"], 8)
    w1, b1 = convt_mats(params["w1"], params["b1"], 16)

    return {
        "wf": jnp.asarray(wf, jnp.bfloat16), "bf": jnp.asarray(bf, jnp.float32),
        "w3": jnp.asarray(w3, jnp.bfloat16), "b3": jnp.asarray(b3, jnp.float32),
        "w2": jnp.asarray(w2, jnp.bfloat16), "b2": jnp.asarray(b2, jnp.float32),
        "w1": jnp.asarray(w1, jnp.bfloat16), "b1": jnp.asarray(b1, jnp.float32),
    }


# -------------------------- deterministic params ---------------------------- #

def init_params(key, c, latent):
    ks = jax.random.split(key, 8)
    out_fc = c * 4 * 4 * 4

    def convw(k, cin, cout):
        return (jax.random.normal(k, (cin, cout, 4, 4), jnp.float32)
                / np.sqrt(cin * 16.0))

    return {
        "c": c,
        "fc_w": jax.random.normal(ks[0], (out_fc, latent), jnp.float32)
                / np.sqrt(latent),
        "fc_b": 0.01 * jax.random.normal(ks[1], (out_fc,), jnp.float32),
        "w3": convw(ks[2], c * 4, c * 2),
        "b3": 0.01 * jax.random.normal(ks[3], (c * 2,), jnp.float32),
        "w2": convw(ks[4], c * 2, c),
        "b2": 0.01 * jax.random.normal(ks[5], (c,), jnp.float32),
        "w1": convw(ks[6], c, 1),
        "b1": 0.01 * jax.random.normal(ks[7], (1,), jnp.float32),
    }


# ------------------------- pure-numpy reference ----------------------------- #

def _convt_ref(x, w, b):  # x: (B,Cin,H,W), w: (Cin,Cout,4,4) -> (B,Cout,2H,2W)
    B, Cin, H, W = x.shape
    Cout = w.shape[1]
    Hout, Wout = 2 * H, 2 * W
    out = np.zeros((B, Cout, Hout, Wout), np.float64)
    for iy in range(H):
        for ix in range(W):
            for ky in range(4):
                for kx in range(4):
                    oy = 2 * iy - 1 + ky
                    ox = 2 * ix - 1 + kx
                    if 0 <= oy < Hout and 0 <= ox < Wout:
                        out[:, :, oy, ox] += x[:, :, iy, ix] @ w[:, :, ky, kx]
    return (out + b[None, :, None, None]).astype(np.float32)


def ref_forward(params, x):
    xn = np.asarray(x, np.float32)
    c = params["c"]
    h = xn @ np.asarray(params["fc_w"]).T + np.asarray(params["fc_b"])
    h = h.reshape(xn.shape[0], c * 4, 4, 4)
    h = np.maximum(_convt_ref(h, np.asarray(params["w3"]),
                              np.asarray(params["b3"])), 0.0)
    h = np.maximum(_convt_ref(h, np.asarray(params["w2"]),
                              np.asarray(params["b2"])), 0.0)
    h = _convt_ref(h, np.asarray(params["w1"]), np.asarray(params["b1"]))
    return 1.0 / (1.0 + np.exp(-h))


# ---------------------------------- main ------------------------------------ #

if __name__ == "__main__":
    B, LATENT, C = 2, 32, 4
    key = jax.random.PRNGKey(0)
    k_param, k_x = jax.random.split(key)
    params = init_params(k_param, C, LATENT)
    prep = prepare_params(params)          # one-time weight prep (hoisted)
    x = jax.random.normal(k_x, (B, LATENT), jnp.float32)

    fwd = jax.jit(decoder_forward)
    y = fwd(prep, x)
    y = jax.block_until_ready(y)
    assert y.shape == (B, 1, 32, 32), y.shape

    y_ref = ref_forward(params, x)
    np.testing.assert_allclose(np.asarray(y), y_ref, rtol=5e-2, atol=5e-2)

    print("KERNEL_OK")
</pallas_src>

<mosaic_0001>
module attributes {stable_mosaic.version = 11 : i64} {
  func.func @_decoder_kernel(%arg0: i32, %arg1: memref<2x32xf32, #tpu.memory_space<vmem>>, %arg2: memref<4x32x64xbf16, #tpu.memory_space<vmem>>, %arg3: memref<4x64xf32, #tpu.memory_space<vmem>>, %arg4: memref<2x128x64xbf16, #tpu.memory_space<vmem>>, %arg5: memref<1x64xf32, #tpu.memory_space<vmem>>, %arg6: memref<2x128x64xbf16, #tpu.memory_space<vmem>>, %arg7: memref<1x64xf32, #tpu.memory_space<vmem>>, %arg8: memref<2x128x32xbf16, #tpu.memory_space<vmem>>, %arg9: memref<1x32xf32, #tpu.memory_space<vmem>>, %arg10: memref<1x32x32xf32, #tpu.memory_space<vmem>>) attributes {dimension_semantics = [#tpu.dimension_semantics<parallel>], iteration_bounds = array<i64: 2>, scalar_prefetch = 0 : i64, scratch_operands = 0 : i64, tpu.core_type = #tpu.core_type<tc>, window_params = [{pipeline_mode = #tpu.pipeline_mode<synchronous>, transform_indices = @transform_0, window_bounds = array<i64: 2, 32>}, {pipeline_mode = #tpu.pipeline_mode<synchronous>, transform_indices = @transform_1, window_bounds = array<i64: 4, 32, 64>}, {pipeline_mode = #tpu.pipeline_mode<synchronous>, transform_indices = @transform_2, window_bounds = array<i64: 4, 64>}, {pipeline_mode = #tpu.pipeline_mode<synchronous>, transform_indices = @transform_3, window_bounds = array<i64: 2, 128, 64>}, {pipeline_mode = #tpu.pipeline_mode<synchronous>, transform_indices = @transform_4, window_bounds = array<i64: 1, 64>}, {pipeline_mode = #tpu.pipeline_mode<synchronous>, transform_indices = @transform_5, window_bounds = array<i64: 2, 128, 64>}, {pipeline_mode = #tpu.pipeline_mode<synchronous>, transform_indices = @transform_6, window_bounds = array<i64: 1, 64>}, {pipeline_mode = #tpu.pipeline_mode<synchronous>, transform_indices = @transform_7, window_bounds = array<i64: 2, 128, 32>}, {pipeline_mode = #tpu.pipeline_mode<synchronous>, transform_indices = @transform_8, window_bounds = array<i64: 1, 32>}, {transform_indices = @transform_9, window_bounds = array<i64: 1, 32, 32>}]} {
    %0 = arith.index_cast %arg0 : i32 to index
    %c0 = arith.constant 0 : index
    %1 = vector.load %arg1[%0, %c0] : memref<2x32xf32, #tpu.memory_space<vmem>>, vector<1x32xf32>
    %2 = arith.truncf %1 : vector<1x32xf32> to vector<1x32xbf16>
    %c0_0 = arith.constant 0 : index
    %c0_1 = arith.constant 0 : index
    %c0_2 = arith.constant 0 : index
    %3 = vector.load %arg2[%c0_0, %c0_1, %c0_2] : memref<4x32x64xbf16, #tpu.memory_space<vmem>>, vector<1x32x64xbf16>
    %4 = vector.shape_cast %3 : vector<1x32x64xbf16> to vector<32x64xbf16>
    %cst = arith.constant dense<0.000000e+00> : vector<1x64xf32>
    %5 = tpu.matmul %2, %4, %cst {dimension_numbers = #tpu.dot_dimension_numbers<[1], [0], [0], [1], [0, 0, 1, 1], [], []>} : vector<1x32xbf16>, vector<32x64xbf16>, vector<1x64xf32> -> vector<1x64xf32>
    %c1 = arith.constant 1 : index
    %c0_3 = arith.constant 0 : index
    %c0_4 = arith.constant 0 : index
    %6 = vector.load %arg2[%c1, %c0_3, %c0_4] : memref<4x32x64xbf16, #tpu.memory_space<vmem>>, vector<1x32x64xbf16>
    %7 = vector.shape_cast %6 : vector<1x32x64xbf16> to vector<32x64xbf16>
    %cst_5 = arith.constant dense<0.000000e+00> : vector<1x64xf32>
    %8 = tpu.matmul %2, %7, %cst_5 {dimension_numbers = #tpu.dot_dimension_numbers<[1], [0], [0], [1], [0, 0, 1, 1], [], []>} : vector<1x32xbf16>, vector<32x64xbf16>, vector<1x64xf32> -> vector<1x64xf32>
    %c2 = arith.constant 2 : index
    %c0_6 = arith.constant 0 : index
    %c0_7 = arith.constant 0 : index
    %9 = vector.load %arg2[%c2, %c0_6, %c0_7] : memref<4x32x64xbf16, #tpu.memory_space<vmem>>, vector<1x32x64xbf16>
    %10 = vector.shape_cast %9 : vector<1x32x64xbf16> to vector<32x64xbf16>
    %cst_8 = arith.constant dense<0.000000e+00> : vector<1x64xf32>
    %11 = tpu.matmul %2, %10, %cst_8 {dimension_numbers = #tpu.dot_dimension_numbers<[1], [0], [0], [1], [0, 0, 1, 1], [], []>} : vector<1x32xbf16>, vector<32x64xbf16>, vector<1x64xf32> -> vector<1x64xf32>
    %c3 = arith.constant 3 : index
    %c0_9 = arith.constant 0 : index
    %c0_10 = arith.constant 0 : index
    %12 = vector.load %arg2[%c3, %c0_9, %c0_10] : memref<4x32x64xbf16, #tpu.memory_space<vmem>>, vector<1x32x64xbf16>
    %13 = vector.shape_cast %12 : vector<1x32x64xbf16> to vector<32x64xbf16>
    %cst_11 = arith.constant dense<0.000000e+00> : vector<1x64xf32>
    %14 = tpu.matmul %2, %13, %cst_11 {dimension_numbers = #tpu.dot_dimension_numbers<[1], [0], [0], [1], [0, 0, 1, 1], [], []>} : vector<1x32xbf16>, vector<32x64xbf16>, vector<1x64xf32> -> vector<1x64xf32>
    %15 = tpu.concatenate %5, %8, %11, %14 in 0 : vector<1x64xf32>, vector<1x64xf32>, vector<1x64xf32>, vector<1x64xf32> -> vector<4x64xf32>
    %c0_12 = arith.constant 0 : index
    %c0_13 = arith.constant 0 : index
    %16 = vector.load %arg3[%c0_12, %c0_13] : memref<4x64xf32, #tpu.memory_space<vmem>>, vector<4x64xf32>
    %17 = arith.addf %15, %16 : vector<4x64xf32>
    %cst_14 = arith.constant 0.000000e+00 : f32
    %18 = vector.broadcast %cst_14 : f32 to vector<1x64xf32>
    %19 = tpu.concatenate %18, %17, %18 in 0 : vector<1x64xf32>, vector<4x64xf32>, vector<1x64xf32> -> vector<6x64xf32>
    %20 = vector.extract_strided_slice %19 {offsets = [0, 0], sizes = [4, 64], strides = [1, 1]} : vector<6x64xf32> to vector<4x64xf32>
    %21 = vector.extract_strided_slice %19 {offsets = [1, 0], sizes = [4, 64], strides = [1, 1]} : vector<6x64xf32> to vector<4x64xf32>
    %22 = tpu.concatenate %20, %21 in 1 : vector<4x64xf32>, vector<4x64xf32> -> vector<4x128xf32>
    %23 = arith.truncf %22 : vector<4x128xf32> to vector<4x128xbf16>
    %c0_15 = arith.constant 0 : index
    %c0_16 = arith.constant 0 : index
    %c0_17 = arith.constant 0 : index
    %24 = vector.load %arg4[%c0_15, %c0_16, %c0_17] : memref<2x128x64xbf16, #tpu.memory_space<vmem>>, vector<1x128x64xbf16>
    %25 = vector.shape_cast %24 : vector<1x128x64xbf16> to vector<128x64xbf16>
    %cst_18 = arith.constant dense<0.000000e+00> : vector<4x64xf32>
    %26 = tpu.matmul %23, %25, %cst_18 {dimension_numbers = #tpu.dot_dimension_numbers<[1], [0], [0], [1], [0, 0, 1, 1], [], []>} : vector<4x128xbf16>, vector<128x64xbf16>, vector<4x64xf32> -> vector<4x64xf32>
    %c0_19 = arith.constant 0 : index
    %c0_20 = arith.constant 0 : index
    %27 = vector.load %arg5[%c0_19, %c0_20] : memref<1x64xf32, #tpu.memory_space<vmem>>, vector<1x64xf32>
    %28 = vector.broadcast %27 : vector<1x64xf32> to vector<4x64xf32>
    %29 = arith.addf %26, %28 : vector<4x64xf32>
    %30 = vector.extract_strided_slice %19 {offsets = [1, 0], sizes = [4, 64], strides = [1, 1]} : vector<6x64xf32> to vector<4x64xf32>
    %31 = vector.extract_strided_slice %19 {offsets = [2, 0], sizes = [4, 64], strides = [1, 1]} : vector<6x64xf32> to vector<4x64xf32>
    %32 = tpu.concatenate %30, %31 in 1 : vector<4x64xf32>, vector<4x64xf32> -> vector<4x128xf32>
    %33 = arith.truncf %32 : vector<4x128xf32> to vector<4x128xbf16>
    %c1_21 = arith.constant 1 : index
    %c0_22 = arith.constant 0 : index
    %c0_23 = arith.constant 0 : index
    %34 = vector.load %arg4[%c1_21, %c0_22, %c0_23] : memref<2x128x64xbf16, #tpu.memory_space<vmem>>, vector<1x128x64xbf16>
    %35 = vector.shape_cast %34 : vector<1x128x64xbf16> to vector<128x64xbf16>
    %cst_24 = arith.constant dense<0.000000e+00> : vector<4x64xf32>
    %36 = tpu.matmul %33, %35, %cst_24 {dimension_numbers = #tpu.dot_dimension_numbers<[1], [0], [0], [1], [0, 0, 1, 1], [], []>} : vector<4x128xbf16>, vector<128x64xbf16>, vector<4x64xf32> -> vector<4x64xf32>
    %c0_25 = arith.constant 0 : index
    %c0_26 = arith.constant 0 : index
    %37 = vector.load %arg5[%c0_25, %c0_26] : memref<1x64xf32, #tpu.memory_space<vmem>>, vector<1x64xf32>
    %38 = vector.broadcast %37 : vector<1x64xf32> to vector<4x64xf32>
    %39 = arith.addf %36, %38 : vector<4x64xf32>
    %40 = vector.shape_cast %29 : vector<4x64xf32> to vector<4x1x64xf32>
    %41 = vector.shape_cast %39 : vector<4x64xf32> to vector<4x1x64xf32>
    %42 = tpu.concatenate %40, %41 in 1 : vector<4x1x64xf32>, vector<4x1x64xf32> -> vector<4x2x64xf32>
    %43 = vector.shape_cast %42 : vector<4x2x64xf32> to vector<8x64xf32>
    %cst_27 = arith.constant 0.000000e+00 : f32
    %44 = vector.broadcast %cst_27 : f32 to vector<8x64xf32>
    %45 = arith.maximumf %43, %44 : vector<8x64xf32>
    %cst_28 = arith.constant 0.000000e+00 : f32
    %46 = vector.broadcast %cst_28 : f32 to vector<1x64xf32>
    %47 = tpu.concatenate %46, %45, %46 in 0 : vector<1x64xf32>, vector<8x64xf32>, vector<1x64xf32> -> vector<10x64xf32>
    %48 = vector.extract_strided_slice %47 {offsets = [0, 0], sizes = [8, 64], strides = [1, 1]} : vector<10x64xf32> to vector<8x64xf32>
    %49 = vector.extract_strided_slice %47 {offsets = [1, 0], sizes = [8, 64], strides = [1, 1]} : vector<10x64xf32> to vector<8x64xf32>
    %50 = tpu.concatenate %48, %49 in 1 : vector<8x64xf32>, vector<8x64xf32> -> vector<8x128xf32>
    %51 = arith.truncf %50 : vector<8x128xf32> to vector<8x128xbf16>
    %c0_29 = arith.constant 0 : index
    %c0_30 = arith.constant 0 : index
    %c0_31 = arith.constant 0 : index
    %52 = vector.load %arg6[%c0_29, %c0_30, %c0_31] : memref<2x128x64xbf16, #tpu.memory_space<vmem>>, vector<1x128x64xbf16>
    %53 = vector.shape_cast %52 : vector<1x128x64xbf16> to vector<128x64xbf16>
    %cst_32 = arith.constant dense<0.000000e+00> : vector<8x64xf32>
    %54 = tpu.matmul %51, %53, %cst_32 {dimension_numbers = #tpu.dot_dimension_numbers<[1], [0], [0], [1], [0, 0, 1, 1], [], []>} : vector<8x128xbf16>, vector<128x64xbf16>, vector<8x64xf32> -> vector<8x64xf32>
    %c0_33 = arith.constant 0 : index
    %c0_34 = arith.constant 0 : index
    %55 = vector.load %arg7[%c0_33, %c0_34] : memref<1x64xf32, #tpu.memory_space<vmem>>, vector<1x64xf32>
    %56 = vector.broadcast %55 : vector<1x64xf32> to vector<8x64xf32>
    %57 = arith.addf %54, %56 : vector<8x64xf32>
    %58 = vector.extract_strided_slice %47 {offsets = [1, 0], sizes = [8, 64], strides = [1, 1]} : vector<10x64xf32> to vector<8x64xf32>
    %59 = vector.extract_strided_slice %47 {offsets = [2, 0], sizes = [8, 64], strides = [1, 1]} : vector<10x64xf32> to vector<8x64xf32>
    %60 = tpu.concatenate %58, %59 in 1 : vector<8x64xf32>, vector<8x64xf32> -> vector<8x128xf32>
    %61 = arith.truncf %60 : vector<8x128xf32> to vector<8x128xbf16>
    %c1_35 = arith.constant 1 : index
    %c0_36 = arith.constant 0 : index
    %c0_37 = arith.constant 0 : index
    %62 = vector.load %arg6[%c1_35, %c0_36, %c0_37] : memref<2x128x64xbf16, #tpu.memory_space<vmem>>, vector<1x128x64xbf16>
    %63 = vector.shape_cast %62 : vector<1x128x64xbf16> to vector<128x64xbf16>
    %cst_38 = arith.constant dense<0.000000e+00> : vector<8x64xf32>
    %64 = tpu.matmul %61, %63, %cst_38 {dimension_numbers = #tpu.dot_dimension_numbers<[1], [0], [0], [1], [0, 0, 1, 1], [], []>} : vector<8x128xbf16>, vector<128x64xbf16>, vector<8x64xf32> -> vector<8x64xf32>
    %c0_39 = arith.constant 0 : index
    %c0_40 = arith.constant 0 : index
    %65 = vector.load %arg7[%c0_39, %c0_40] : memref<1x64xf32, #tpu.memory_space<vmem>>, vector<1x64xf32>
    %66 = vector.broadcast %65 : vector<1x64xf32> to vector<8x64xf32>
    %67 = arith.addf %64, %66 : vector<8x64xf32>
    %68 = vector.shape_cast %57 : vector<8x64xf32> to vector<8x1x64xf32>
    %69 = vector.shape_cast %67 : vector<8x64xf32> to vector<8x1x64xf32>
    %70 = tpu.concatenate %68, %69 in 1 : vector<8x1x64xf32>, vector<8x1x64xf32> -> vector<8x2x64xf32>
    %71 = vector.shape_cast %70 : vector<8x2x64xf32> to vector<16x64xf32>
    %cst_41 = arith.constant 0.000000e+00 : f32
    %72 = vector.broadcast %cst_41 : f32 to vector<16x64xf32>
    %73 = arith.maximumf %71, %72 : vector<16x64xf32>
    %cst_42 = arith.constant 0.000000e+00 : f32
    %74 = vector.broadcast %cst_42 : f32 to vector<1x64xf32>
    %75 = tpu.concatenate %74, %73, %74 in 0 : vector<1x64xf32>, vector<16x64xf32>, vector<1x64xf32> -> vector<18x64xf32>
    %76 = vector.extract_strided_slice %75 {offsets = [0, 0], sizes = [16, 64], strides = [1, 1]} : vector<18x64xf32> to vector<16x64xf32>
    %77 = vector.extract_strided_slice %75 {offsets = [1, 0], sizes = [16, 64], strides = [1, 1]} : vector<18x64xf32> to vector<16x64xf32>
    %78 = tpu.concatenate %76, %77 in 1 : vector<16x64xf32>, vector<16x64xf32> -> vector<16x128xf32>
    %79 = arith.truncf %78 : vector<16x128xf32> to vector<16x128xbf16>
    %c0_43 = arith.constant 0 : index
    %c0_44 = arith.constant 0 : index
    %c0_45 = arith.constant 0 : index
    %80 = vector.load %arg8[%c0_43, %c0_44, %c0_45] : memref<2x128x32xbf16, #tpu.memory_space<vmem>>, vector<1x128x32xbf16>
    %81 = vector.shape_cast %80 : vector<1x128x32xbf16> to vector<128x32xbf16>
    %cst_46 = arith.constant dense<0.000000e+00> : vector<16x32xf32>
    %82 = tpu.matmul %79, %81, %cst_46 {dimension_numbers = #tpu.dot_dimension_numbers<[1], [0], [0], [1], [0, 0, 1, 1], [], []>} : vector<16x128xbf16>, vector<128x32xbf16>, vector<16x32xf32> -> vector<16x32xf32>
    %c0_47 = arith.constant 0 : index
    %c0_48 = arith.constant 0 : index
    %83 = vector.load %arg9[%c0_47, %c0_48] : memref<1x32xf32, #tpu.memory_space<vmem>>, vector<1x32xf32>
    %84 = vector.broadcast %83 : vector<1x32xf32> to vector<16x32xf32>
    %85 = arith.addf %82, %84 : vector<16x32xf32>
    %86 = vector.extract_strided_slice %75 {offsets = [1, 0], sizes = [16, 64], strides = [1, 1]} : vector<18x64xf32> to vector<16x64xf32>
    %87 = vector.extract_strided_slice %75 {offsets = [2, 0], sizes = [16, 64], strides = [1, 1]} : vector<18x64xf32> to vector<16x64xf32>
    %88 = tpu.concatenate %86, %87 in 1 : vector<16x64xf32>, vector<16x64xf32> -> vector<16x128xf32>
    %89 = arith.truncf %88 : vector<16x128xf32> to vector<16x128xbf16>
    %c1_49 = arith.constant 1 : index
    %c0_50 = arith.constant 0 : index
    %c0_51 = arith.constant 0 : index
    %90 = vector.load %arg8[%c1_49, %c0_50, %c0_51] : memref<2x128x32xbf16, #tpu.memory_space<vmem>>, vector<1x128x32xbf16>
    %91 = vector.shape_cast %90 : vector<1x128x32xbf16> to vector<128x32xbf16>
    %cst_52 = arith.constant dense<0.000000e+00> : vector<16x32xf32>
    %92 = tpu.matmul %89, %91, %cst_52 {dimension_numbers = #tpu.dot_dimension_numbers<[1], [0], [0], [1], [0, 0, 1, 1], [], []>} : vector<16x128xbf16>, vector<128x32xbf16>, vector<16x32xf32> -> vector<16x32xf32>
    %c0_53 = arith.constant 0 : index
    %c0_54 = arith.constant 0 : index
    %93 = vector.load %arg9[%c0_53, %c0_54] : memref<1x32xf32, #tpu.memory_space<vmem>>, vector<1x32xf32>
    %94 = vector.broadcast %93 : vector<1x32xf32> to vector<16x32xf32>
    %95 = arith.addf %92, %94 : vector<16x32xf32>
    %96 = vector.shape_cast %85 : vector<16x32xf32> to vector<16x1x32xf32>
    %97 = vector.shape_cast %95 : vector<16x32xf32> to vector<16x1x32xf32>
    %98 = tpu.concatenate %96, %97 in 1 : vector<16x1x32xf32>, vector<16x1x32xf32> -> vector<16x2x32xf32>
    %99 = vector.shape_cast %98 : vector<16x2x32xf32> to vector<32x32xf32>
    %100 = arith.negf %99 : vector<32x32xf32>
    %101 = math.exp %100 : vector<32x32xf32>
    %cst_55 = arith.constant 1.000000e+00 : f32
    %102 = vector.broadcast %cst_55 : f32 to vector<32x32xf32>
    %103 = arith.addf %102, %101 : vector<32x32xf32>
    %104 = arith.divf %102, %103 : vector<32x32xf32>
    %c0_56 = arith.constant 0 : index
    %c0_57 = arith.constant 0 : index
    %c0_58 = arith.constant 0 : index
    %105 = vector.load %arg10[%c0_56, %c0_57, %c0_58] : memref<1x32x32xf32, #tpu.memory_space<vmem>>, vector<1x32x32xf32>
    %106 = vector.shape_cast %105 : vector<1x32x32xf32> to vector<32x32xf32>
    %107 = vector.shape_cast %104 : vector<32x32xf32> to vector<1x32x32xf32>
    tpu.vector_store %arg10[%c0_56, %c0_57, %c0_58], %107 {strides = array<i32>} : memref<1x32x32xf32, #tpu.memory_space<vmem>>, vector<1x32x32xf32>,
    return
  }
  func.func @transform_0(%arg0: i32) -> (i32, i32) {
    %c0_i32 = arith.constant 0 : i32
    %c0_i32_0 = arith.constant 0 : i32
    %c0_i32_1 = arith.constant 0 : i32
    return %c0_i32, %c0_i32_0 : i32, i32
  }
  func.func @transform_1(%arg0: i32) -> (i32, i32, i32) {
    %c0_i32 = arith.constant 0 : i32
    %c0_i32_0 = arith.constant 0 : i32
    %c0_i32_1 = arith.constant 0 : i32
    %c0_i32_2 = arith.constant 0 : i32
    return %c0_i32, %c0_i32_0, %c0_i32_1 : i32, i32, i32
  }
  func.func @transform_2(%arg0: i32) -> (i32, i32) {
    %c0_i32 = arith.constant 0 : i32
    %c0_i32_0 = arith.constant 0 : i32
    %c0_i32_1 = arith.constant 0 : i32
    return %c0_i32, %c0_i32_0 : i32, i32
  }
  func.func @transform_3(%arg0: i32) -> (i32, i32, i32) {
    %c0_i32 = arith.constant 0 : i32
    %c0_i32_0 = arith.constant 0 : i32
    %c0_i32_1 = arith.constant 0 : i32
    %c0_i32_2 = arith.constant 0 : i32
    return %c0_i32, %c0_i32_0, %c0_i32_1 : i32, i32, i32
  }
  func.func @transform_4(%arg0: i32) -> (i32, i32) {
    %c0_i32 = arith.constant 0 : i32
    %c0_i32_0 = arith.constant 0 : i32
    %c0_i32_1 = arith.constant 0 : i32
    return %c0_i32, %c0_i32_0 : i32, i32
  }
  func.func @transform_5(%arg0: i32) -> (i32, i32, i32) {
    %c0_i32 = arith.constant 0 : i32
    %c0_i32_0 = arith.constant 0 : i32
    %c0_i32_1 = arith.constant 0 : i32
    %c0_i32_2 = arith.constant 0 : i32
    return %c0_i32, %c0_i32_0, %c0_i32_1 : i32, i32, i32
  }
  func.func @transform_6(%arg0: i32) -> (i32, i32) {
    %c0_i32 = arith.constant 0 : i32
    %c0_i32_0 = arith.constant 0 : i32
    %c0_i32_1 = arith.constant 0 : i32
    return %c0_i32, %c0_i32_0 : i32, i32
  }
  func.func @transform_7(%arg0: i32) -> (i32, i32, i32) {
    %c0_i32 = arith.constant 0 : i32
    %c0_i32_0 = arith.constant 0 : i32
    %c0_i32_1 = arith.constant 0 : i32
    %c0_i32_2 = arith.constant 0 : i32
    return %c0_i32, %c0_i32_0, %c0_i32_1 : i32, i32, i32
  }
  func.func @transform_8(%arg0: i32) -> (i32, i32) {
    %c0_i32 = arith.constant 0 : i32
    %c0_i32_0 = arith.constant 0 : i32
    %c0_i32_1 = arith.constant 0 : i32
    return %c0_i32, %c0_i32_0 : i32, i32
  }
  func.func @transform_9(%arg0: i32) -> (i32, i32, i32) {
    %c0_i32 = arith.constant 0 : i32
    %c0_i32_0 = arith.constant 0 : i32
    %c0_i32_1 = arith.constant 0 : i32
    return %arg0, %c0_i32, %c0_i32_0 : i32, i32, i32
  }
}

</mosaic_0001>

<llo_original>
// kernel: decoder_forward.1
$region0: #{decoder_forward.1}
  #allocation0 [shape = 'u32[]', space=smem, size = 0x4, offset = 0x4, fixed_abs, tag = 'smem constant byte address 0x4 - core index']
  #allocation1 [shape = 'u32[144,128]{1,0:T(1,128)}', space=vmem, size = 0x12000, scoped, tag = 'internal scratch']
  %s0 = inlined_call_operand.vmem [shape: f32[2,32], index: 0, kind: input, shape index: {}]
  %s1 = inlined_call_operand.vmem [shape: bf16[4,32,64], index: 1, kind: input, shape index: {}]
  %s2 = inlined_call_operand.vmem [shape: f32[4,64], index: 2, kind: input, shape index: {}]
  %s3 = inlined_call_operand.vmem [shape: bf16[2,128,64], index: 3, kind: input, shape index: {}]
  %s4 = inlined_call_operand.vmem [shape: f32[1,64], index: 4, kind: input, shape index: {}]
  %s5 = inlined_call_operand.vmem [shape: bf16[2,128,64], index: 5, kind: input, shape index: {}]
  %s6 = inlined_call_operand.vmem [shape: f32[1,64], index: 6, kind: input, shape index: {}]
  %s7 = inlined_call_operand.vmem [shape: bf16[2,128,32], index: 7, kind: input, shape index: {}]
  %s8 = inlined_call_operand.vmem [shape: f32[1,32], index: 8, kind: input, shape index: {}]
  %s9 = inlined_call_operand.hbm [shape: f32[2,32,32], index: 9, kind: output, shape index: {}]
  %s10 = sld [smem:[#allocation0]]
  $region69: #{decoder_forward.1} parent=0
    _
  %s12 = ssub.s32 1, %s10
  %s13 = scalar_select 0, %s12, %s10
  $region1: #{decoder_forward.1} parent=0
    #allocation2 [shape = 'u8[32768]{0}', space=vmem, size = 0x8000, scoped, tag = 'output window, operand 0']
    #allocation3 [shape = 's32[2]{0}', space=sflag, size = 0x8, scoped, tag = 'scoped memory for decoder_forward.1']
    %14 = vsyncpa [#allocation3], 0
    %s15 = scalar_lea.sflag [#allocation3], 1
    %16 = vsyncpa %s15, 0
    loop: start=0, step=1, limit=4
    $region2: #{decoder_forward.1} parent=1 // loop_pre_header
      _
    $region3: #{decoder_forward.1} parent=1 // loop_header
      %s18 = sphi 0, %s22
      %p19 = scmp.ge.s32.totalorder %s18, 4
      %s26 = sphi 0, %s26
      %s28 = sphi 0, %s26
      %s29 = sphi 0, %s28
      %s43 = sphi 0, %s29
      %s47 = sphi 0, %s47
      %s49 = sphi 0, %s47
      %s50 = sphi 0, %s49
      %s64 = sphi 0, %s50
      %s68 = sphi 0, %s68
      %s70 = sphi 0, %s68
      %s71 = sphi 0, %s70
      %s85 = sphi 0, %s71
      %s89 = sphi 0, %s89
      %s91 = sphi 0, %s89
      %s92 = sphi 0, %s91
      %s106 = sphi 0, %s92
      %s110 = sphi 0, %s110
      %s112 = sphi 0, %s110
      %s113 = sphi 0, %s112
      %s127 = sphi 0, %s113
      %s131 = sphi 0, %s131
      %s133 = sphi 0, %s131
      %s134 = sphi 0, %s133
      %s148 = sphi 0, %s134
      %s152 = sphi 0, %s152
      %s154 = sphi 0, %s152
      %s155 = sphi 0, %s154
      %s169 = sphi 0, %s155
      %s173 = sphi 0, %s173
      %s175 = sphi 0, %s173
      %s176 = sphi 0, %s175
      %s190 = sphi 0, %s176
      %s194 = sphi 0, %s194
      %s196 = sphi 0, %s194
      %s197 = sphi 0, %s196
      %s211 = sphi 0, %s197
      %s217 = sphi 0, %s219
      %s220 = sphi 0, %s217
      %s221 = sphi 0, %s220
      %s237 = sphi 0, %s221
    $region4: #{decoder_forward.1} parent=1 // loop_header_branch
      %21 = sbr.rel (%p19) target = $region8
    $region5: #{decoder_forward.1} parent=1 // loop_body
      %s23 = ssub.s32 %s18, 1
      %s24 = ssub.s32 %s18, 2
      %s25 = sadd.s32 %s18, 1
      %s27 = sadd.s32 %s26, 1
      %p30 = scmp.eq.s32.totalorder %s18, 1
      %p31 = scmp.ne.s32.totalorder %s26, %s28
      %p32 = scmp.eq.s32.totalorder %s18, 0
      %p33 = por %p31, %p32
      %p34 = scmp.ne.s32.totalorder %s26, %s28
      %p35 = scmp.eq.s32.totalorder %s23, 1
      %p36 = por %p34, %p35
      %p37 = scmp.ne.s32.totalorder %s28, %s29
      %p38 = scmp.eq.s32.totalorder %s23, 0
      %p39 = por %p37, %p38
      %p40 = scmp.ne.s32.totalorder %s28, %s29
      %p41 = scmp.eq.s32.totalorder %s24, 1
      %p42 = por %p40, %p41
      %p44 = scmp.ne.s32.totalorder %s29, %s43
      %p45 = scmp.eq.s32.totalorder %s24, 0
      %p46 = por %p44, %p45
      %s48 = sadd.s32 %s47, 1
      %p51 = scmp.eq.s32.totalorder %s18, 1
      %p52 = scmp.ne.s32.totalorder %s47, %s49
      %p53 = scmp.eq.s32.totalorder %s18, 0
      %p54 = por %p52, %p53
      %p55 = scmp.ne.s32.totalorder %s47, %s49
      %p56 = scmp.eq.s32.totalorder %s23, 1
      %p57 = por %p55, %p56
      %p58 = scmp.ne.s32.totalorder %s49, %s50
      %p59 = scmp.eq.s32.totalorder %s23, 0
      %p60 = por %p58, %p59
      %p61 = scmp.ne.s32.totalorder %s49, %s50
      %p62 = scmp.eq.s32.totalorder %s24, 1
      %p63 = por %p61, %p62
      %p65 = scmp.ne.s32.totalorder %s50, %s64
      %p66 = scmp.eq.s32.totalorder %s24, 0
      %p67 = por %p65, %p66
      %s69 = sadd.s32 %s68, 1
      %p72 = scmp.eq.s32.totalorder %s18, 1
      %p73 = scmp.ne.s32.totalorder %s68, %s70
      %p74 = scmp.eq.s32.totalorder %s18, 0
      %p75 = por %p73, %p74
      %p76 = scmp.ne.s32.totalorder %s68, %s70
      %p77 = scmp.eq.s32.totalorder %s23, 1
      %p78 = por %p76, %p77
      %p79 = scmp.ne.s32.totalorder %s70, %s71
      %p80 = scmp.eq.s32.totalorder %s23, 0
      %p81 = por %p79, %p80
      %p82 = scmp.ne.s32.totalorder %s70, %s71
      %p83 = scmp.eq.s32.totalorder %s24, 1
      %p84 = por %p82, %p83
      %p86 = scmp.ne.s32.totalorder %s71, %s85
      %p87 = scmp.eq.s32.totalorder %s24, 0
      %p88 = por %p86, %p87
      %s90 = sadd.s32 %s89, 1
      %p93 = scmp.eq.s32.totalorder %s18, 1
      %p94 = scmp.ne.s32.totalorder %s89, %s91
      %p95 = scmp.eq.s32.totalorder %s18, 0
      %p96 = por %p94, %p95
      %p97 = scmp.ne.s32.totalorder %s89, %s91
      %p98 = scmp.eq.s32.totalorder %s23, 1
      %p99 = por %p97, %p98
      %p100 = scmp.ne.s32.totalorder %s91, %s92
      %p101 = scmp.eq.s32.totalorder %s23, 0
      %p102 = por %p100, %p101
      %p103 = scmp.ne.s32.totalorder %s91, %s92
      %p104 = scmp.eq.s32.totalorder %s24, 1
      %p105 = por %p103, %p104
      %p107 = scmp.ne.s32.totalorder %s92, %s106
      %p108 = scmp.eq.s32.totalorder %s24, 0
      %p109 = por %p107, %p108
      %s111 = sadd.s32 %s110, 1
      %p114 = scmp.eq.s32.totalorder %s18, 1
      %p115 = scmp.ne.s32.totalorder %s110, %s112
      %p116 = scmp.eq.s32.totalorder %s18, 0
      %p117 = por %p115, %p116
      %p118 = scmp.ne.s32.totalorder %s110, %s112
      %p119 = scmp.eq.s32.totalorder %s23, 1
      %p120 = por %p118, %p119
      %p121 = scmp.ne.s32.totalorder %s112, %s113
      %p122 = scmp.eq.s32.totalorder %s23, 0
      %p123 = por %p121, %p122
      %p124 = scmp.ne.s32.totalorder %s112, %s113
      %p125 = scmp.eq.s32.totalorder %s24, 1
      %p126 = por %p124, %p125
      %p128 = scmp.ne.s32.totalorder %s113, %s127
      %p129 = scmp.eq.s32.totalorder %s24, 0
      %p130 = por %p128, %p129
      %s132 = sadd.s32 %s131, 1
      %p135 = scmp.eq.s32.totalorder %s18, 1
      %p136 = scmp.ne.s32.totalorder %s131, %s133
      %p137 = scmp.eq.s32.totalorder %s18, 0
      %p138 = por %p136, %p137
      %p139 = scmp.ne.s32.totalorder %s131, %s133
      %p140 = scmp.eq.s32.totalorder %s23, 1
      %p141 = por %p139, %p140
      %p142 = scmp.ne.s32.totalorder %s133, %s134
      %p143 = scmp.eq.s32.totalorder %s23, 0
      %p144 = por %p142, %p143
      %p145 = scmp.ne.s32.totalorder %s133, %s134
      %p146 = scmp.eq.s32.totalorder %s24, 1
      %p147 = por %p145, %p146
      %p149 = scmp.ne.s32.totalorder %s134, %s148
      %p150 = scmp.eq.s32.totalorder %s24, 0
      %p151 = por %p149, %p150
      %s153 = sadd.s32 %s152, 1
      %p156 = scmp.eq.s32.totalorder %s18, 1
      %p157 = scmp.ne.s32.totalorder %s152, %s154
      %p158 = scmp.eq.s32.totalorder %s18, 0
      %p159 = por %p157, %p158
      %p160 = scmp.ne.s32.totalorder %s152, %s154
      %p161 = scmp.eq.s32.totalorder %s23, 1
      %p162 = por %p160, %p161
      %p163 = scmp.ne.s32.totalorder %s154, %s155
      %p164 = scmp.eq.s32.totalorder %s23, 0
      %p165 = por %p163, %p164
      %p166 = scmp.ne.s32.totalorder %s154, %s155
      %p167 = scmp.eq.s32.totalorder %s24, 1
      %p168 = por %p166, %p167
      %p170 = scmp.ne.s32.totalorder %s155, %s169
      %p171 = scmp.eq.s32.totalorder %s24, 0
      %p172 = por %p170, %p171
      %s174 = sadd.s32 %s173, 1
      %p177 = scmp.eq.s32.totalorder %s18, 1
      %p178 = scmp.ne.s32.totalorder %s173, %s175
      %p179 = scmp.eq.s32.totalorder %s18, 0
      %p180 = por %p178, %p179
      %p181 = scmp.ne.s32.totalorder %s173, %s175
      %p182 = scmp.eq.s32.totalorder %s23, 1
      %p183 = por %p181, %p182
      %p184 = scmp.ne.s32.totalorder %s175, %s176
      %p185 = scmp.eq.s32.totalorder %s23, 0
      %p186 = por %p184, %p185
      %p187 = scmp.ne.s32.totalorder %s175, %s176
      %p188 = scmp.eq.s32.totalorder %s24, 1
      %p189 = por %p187, %p188
      %p191 = scmp.ne.s32.totalorder %s176, %s190
      %p192 = scmp.eq.s32.totalorder %s24, 0
      %p193 = por %p191, %p192
      %s195 = sadd.s32 %s194, 1
      %p198 = scmp.eq.s32.totalorder %s18, 1
      %p199 = scmp.ne.s32.totalorder %s194, %s196
      %p200 = scmp.eq.s32.totalorder %s18, 0
      %p201 = por %p199, %p200
      %p202 = scmp.ne.s32.totalorder %s194, %s196
      %p203 = scmp.eq.s32.totalorder %s23, 1
      %p204 = por %p202, %p203
      %p205 = scmp.ne.s32.totalorder %s196, %s197
      %p206 = scmp.eq.s32.totalorder %s23, 0
      %p207 = por %p205, %p206
      %p208 = scmp.ne.s32.totalorder %s196, %s197
      %p209 = scmp.eq.s32.totalorder %s24, 1
      %p210 = por %p208, %p209
      %p212 = scmp.ne.s32.totalorder %s197, %s211
      %p213 = scmp.eq.s32.totalorder %s24, 0
      %p214 = por %p212, %p213
      %s215 = ssub.s32 %s18, %s25
      %p216 = scmp.eq.s32.totalorder %s215, 0
      %s218 = sadd.s32 %s217, 1
      %s219 = scalar_select %p216, %s217, %s218
      %p222 = pneg %p216
      %p223 = scmp.eq.s32.totalorder %s18, 1
      %p224 = por %p222, %p223
      %p225 = scmp.ne.s32.totalorder %s217, %s220
      %p226 = scmp.eq.s32.totalorder %s18, 0
      %p227 = por %p225, %p226
      %p228 = scmp.ne.s32.totalorder %s217, %s220
      %p229 = scmp.eq.s32.totalorder %s23, 1
      %p230 = por %p228, %p229
      %p231 = scmp.ne.s32.totalorder %s220, %s221
      %p232 = scmp.eq.s32.totalorder %s23, 0
      %p233 = por %p231, %p232
      %p234 = scmp.ne.s32.totalorder %s220, %s221
      %p235 = scmp.eq.s32.totalorder %s24, 1
      %p236 = por %p234, %p235
      %p238 = scmp.ne.s32.totalorder %s221, %s237
      %p239 = scmp.eq.s32.totalorder %s24, 0
      %p240 = por %p238, %p239
      %p241 = scmp.le.s32.totalorder 1, %s18
      %p242 = scmp.lt.s32.totalorder %s18, 3
      %p243 = pnand %p241, %p242
      %p244 = pneg %p243
      // Predicated region
      $region9: #{decoder_forward.1} parent=5 // pred_check
        _
      $region10: #{decoder_forward.1} parent=5 // pred_check_branch
        %246 = sbr.rel (%p243) target = $region12
      $region11: #{decoder_forward.1} parent=5 // pred_region
        %s247 = ssub.s32 %s18, 1
        // Predicated region
        $region13: #{decoder_forward.1} parent=11 // pred_check
          %p248 = pneg %p39
        $region14: #{decoder_forward.1} parent=11 // pred_check_branch
          %250 = sbr.rel (%p248) target = $region16
        $region15: #{decoder_forward.1} parent=11 // pred_region
          _
        $region16: #{decoder_forward.1} parent=11 // pred_fallthru
          _
        // Predicated region
        $region17: #{decoder_forward.1} parent=11 // pred_check
          %p251 = pneg %p60
        $region18: #{decoder_forward.1} parent=11 // pred_check_branch
          %253 = sbr.rel (%p251) target = $region20
        $region19: #{decoder_forward.1} parent=11 // pred_region
          _
        $region20: #{decoder_forward.1} parent=11 // pred_fallthru
          _
        // Predicated region
        $region21: #{decoder_forward.1} parent=11 // pred_check
          %p254 = pneg %p81
        $region22: #{decoder_forward.1} parent=11 // pred_check_branch
          %256 = sbr.rel (%p254) target = $region24
        $region23: #{decoder_forward.1} parent=11 // pred_region
          _
        $region24: #{decoder_forward.1} parent=11 // pred_fallthru
          _
        // Predicated region
        $region25: #{decoder_forward.1} parent=11 // pred_check
          %p257 = pneg %p102
        $region26: #{decoder_forward.1} parent=11 // pred_check_branch
          %259 = sbr.rel (%p257) target = $region28
        $region27: #{decoder_forward.1} parent=11 // pred_region
          _
        $region28: #{decoder_forward.1} parent=11 // pred_fallthru
          _
        // Predicated region
        $region29: #{decoder_forward.1} parent=11 // pred_check
          %p260 = pneg %p123
        $region30: #{decoder_forward.1} parent=11 // pred_check_branch
          %262 = sbr.rel (%p260) target = $region32
        $region31: #{decoder_forward.1} parent=11 // pred_region
          _
        $region32: #{decoder_forward.1} parent=11 // pred_fallthru
          _
        // Predicated region
        $region33: #{decoder_forward.1} parent=11 // pred_check
          %p263 = pneg %p144
        $region34: #{decoder_forward.1} parent=11 // pred_check_branch
          %265 = sbr.rel (%p263) target = $region36
        $region35: #{decoder_forward.1} parent=11 // pred_region
          _
        $region36: #{decoder_forward.1} parent=11 // pred_fallthru
          _
        // Predicated region
        $region37: #{decoder_forward.1} parent=11 // pred_check
          %p266 = pneg %p165
        $region38: #{decoder_forward.1} parent=11 // pred_check_branch
          %268 = sbr.rel (%p266) target = $region40
        $region39: #{decoder_forward.1} parent=11 // pred_region
          _
        $region40: #{decoder_forward.1} parent=11 // pred_fallthru
          _
        // Predicated region
        $region41: #{decoder_forward.1} parent=11 // pred_check
          %p269 = pneg %p186
        $region42: #{decoder_forward.1} parent=11 // pred_check_branch
          %271 = sbr.rel (%p269) target = $region44
        $region43: #{decoder_forward.1} parent=11 // pred_region
          _
        $region44: #{decoder_forward.1} parent=11 // pred_fallthru
          _
        // Predicated region
        $region45: #{decoder_forward.1} parent=11 // pred_check
          %p272 = pneg %p207
        $region46: #{decoder_forward.1} parent=11 // pred_check_branch
          %274 = sbr.rel (%p272) target = $region48
        $region47: #{decoder_forward.1} parent=11 // pred_region
          _
        $region48: #{decoder_forward.1} parent=11 // pred_fallthru
          _
      $region12: #{decoder_forward.1} parent=5 // pred_fallthru
        _
      %p275 = scmp.lt.s32.totalorder %s18, 2
      // Predicated region
      $region49: #{decoder_forward.1} parent=5 // pred_check
        %p276 = pneg %p275
      $region50: #{decoder_forward.1} parent=5 // pred_check_branch
        %278 = sbr.rel (%p276) target = $region52
      $region51: #{decoder_forward.1} parent=5 // pred_region
        _
      $region52: #{decoder_forward.1} parent=5 // pred_fallthru
        _
      %p279 = scmp.le.s32.totalorder 1, %s18
      %p280 = scmp.lt.s32.totalorder %s18, 3
      %p281 = pnand %p279, %p280
      %p282 = pneg %p281
      // Predicated region
      $region53: #{decoder_forward.1} parent=5 // pred_check
        _
      $region54: #{decoder_forward.1} parent=5 // pred_check_branch
        %284 = sbr.rel (%p281) target = $region56
      $region55: #{decoder_forward.1} parent=5 // pred_region
        %s285 = ssub.s32 %s18, 1
        %p286 = pneg %p39
        %p287 = pneg %p36
        %p288 = pneg %p60
        %p289 = pneg %p57
        %p290 = pneg %p81
        %p291 = pneg %p78
        %p292 = pneg %p102
        %p293 = pneg %p99
        %p294 = pneg %p123
        %p295 = pneg %p120
        %p296 = pneg %p144
        %p297 = pneg %p141
        %p298 = pneg %p165
        %p299 = pneg %p162
        %p300 = pneg %p186
        %p301 = pneg %p183
        %p302 = pneg %p207
        %p303 = pneg %p204
        %p304 = pneg %p233
        %p305 = pneg %p230
        %s306 = sand.u32 %s220, 1
        %s307 = scalar_lea.sflag [#allocation3], %s306
        %s308 = sand.u32 %s220, 1
        %s309 = smul.addr %s308, 32
        %s310 = scalar_lea.vmem [#allocation2], %s309
        %s312 = scalar_lea.vmem %s0, %s23
        %v313 = vld [vmem:[%s312] sm:$0x1]
        %v314 = vpack.c.bf16 %v313, %v313
        %v315 = vld [vmem:[%s1] sm:$0xf]
        %v316 = vld [vmem:[%s1 + $0x4] sm:$0xf]
        %v317 = vld [vmem:[%s1 + $0x8] sm:$0xf]
        %v318 = vld [vmem:[%s1 + $0xc] sm:$0xf]
        %v323 = vunpack.c.l.b16 %v315
        %v324 = vunpack.c.l.b16 %v316
        %v325 = vunpack.c.l.b16 %v317
        %v326 = vunpack.c.l.b16 %v318
        %v327 = vpack.c.b16 %v324, %v323
        %v328 = vpack.c.b16 %v326, %v325
        %vm331 = vcmask 261120
        %v333 = vsel %vm331, %v314, 0
        %335 = vmatprep.subr.bf16.mxu0 0
        %336 = vmatpush1.bf16.msra.mxu0 0
        %337 = vmatprep.subr.bf16.mxu0 0
        %338 = vmatpush1.bf16.msra.mxu0 0
        %339 = vmatprep.subr.bf16.mxu0 0
        %340 = vmatpush1.bf16.msra.mxu0 0
        %341 = vmatprep.subr.bf16.mxu0 0
        %342 = vmatpush1.bf16.msra.mxu0 0
        %343 = vmatprep.subr.bf16.mxu0 0
        %344 = vmatpush1.bf16.msra.mxu0 0
        %345 = vmatprep.subr.bf16.mxu0 0
        %346 = vmatpush1.bf16.msra.mxu0 0
        %347 = vmatprep.subr.bf16.mxu0 0
        %348 = vmatpush1.bf16.msra.mxu0 %v328
        %349 = vmatprep.subr.bf16.mxu0 0
        %350 = vmatpush1.bf16.msra.mxu0 %v327
        %351 = vmatprep.subr.bf16.mxu0 0
        %352 = vmatpush2.bf16.msra.mxu0 0
        %353 = vmatprep.subr.bf16.mxu0 0
        %354 = vmatpush2.bf16.msra.mxu0 0
        %355 = vmatprep.subr.bf16.mxu0 0
        %356 = vmatpush2.bf16.msra.mxu0 0
        %357 = vmatprep.subr.bf16.mxu0 0
        %358 = vmatpush2.bf16.msra.mxu0 0
        %359 = vmatprep.subr.bf16.mxu0 0
        %360 = vmatpush2.bf16.msra.mxu0 0
        %361 = vmatprep.subr.bf16.mxu0 0
        %362 = vmatpush2.bf16.msra.mxu0 0
        %363 = vmatprep.subr.bf16.mxu0 0
        %364 = vmatpush2.bf16.msra.mxu0 0
        %365 = vmatprep.subr.bf16.mxu0 0
        %366 = vmatpush2.bf16.msra.mxu0 0
        %367 = vmatprep.mubr.bf16.mxu0 0
        %368 = vmatmul.mubr.bf16.gmra.mxu0 %v333
        %v369 = vpop.f32.mrf.mxu0
        %v370 = vadd.f32 0.0, %v369
        %v371 = vpop.f32.mrf.mxu0
        %v372 = vpop.f32.mrf.mxu0
        %v373 = vpop.f32.mrf.mxu0
        %374 = vdwg.mxu0
        %s375 = scalar_lea.vmem %s1, 16
        %v376 = vld [vmem:[%s375] sm:$0xf]
        %v377 = vld [vmem:[%s375 + $0x4] sm:$0xf]
        %v378 = vld [vmem:[%s375 + $0x8] sm:$0xf]
        %v379 = vld [vmem:[%s375 + $0xc] sm:$0xf]
        %v384 = vunpack.c.l.b16 %v376
        %v385 = vunpack.c.l.b16 %v377
        %v386 = vunpack.c.l.b16 %v378
        %v387 = vunpack.c.l.b16 %v379
        %v388 = vpack.c.b16 %v385, %v384
        %v389 = vpack.c.b16 %v387, %v386
        %392 = vmatprep.subr.bf16.mxu0 0
        %393 = vmatpush1.bf16.msra.mxu0 0
        %394 = vmatprep.subr.bf16.mxu0 0
        %395 = vmatpush1.bf16.msra.mxu0 0
        %396 = vmatprep.subr.bf16.mxu0 0
        %397 = vmatpush1.bf16.msra.mxu0 0
        %398 = vmatprep.subr.bf16.mxu0 0
        %399 = vmatpush1.bf16.msra.mxu0 0
        %400 = vmatprep.subr.bf16.mxu0 0
        %401 = vmatpush1.bf16.msra.mxu0 0
        %402 = vmatprep.subr.bf16.mxu0 0
        %403 = vmatpush1.bf16.msra.mxu0 0
        %404 = vmatprep.subr.bf16.mxu0 0
        %405 = vmatpush1.bf16.msra.mxu0 %v389
        %406 = vmatprep.subr.bf16.mxu0 0
        %407 = vmatpush1.bf16.msra.mxu0 %v388
        %408 = vmatprep.subr.bf16.mxu0 0
        %409 = vmatpush2.bf16.msra.mxu0 0
        %410 = vmatprep.subr.bf16.mxu0 0
        %411 = vmatpush2.bf16.msra.mxu0 0
        %412 = vmatprep.subr.bf16.mxu0 0
        %413 = vmatpush2.bf16.msra.mxu0 0
        %414 = vmatprep.subr.bf16.mxu0 0
        %415 = vmatpush2.bf16.msra.mxu0 0
        %416 = vmatprep.subr.bf16.mxu0 0
        %417 = vmatpush2.bf16.msra.mxu0 0
        %418 = vmatprep.subr.bf16.mxu0 0
        %419 = vmatpush2.bf16.msra.mxu0 0
        %420 = vmatprep.subr.bf16.mxu0 0
        %421 = vmatpush2.bf16.msra.mxu0 0
        %422 = vmatprep.subr.bf16.mxu0 0
        %423 = vmatpush2.bf16.msra.mxu0 0
        %424 = vmatprep.mubr.bf16.mxu0 0
        %425 = vmatmul.mubr.bf16.gmra.mxu0 %v333
        %v426 = vpop.f32.mrf.mxu0
        %v427 = vadd.f32 0.0, %v426
        %v428 = vpop.f32.mrf.mxu0
        %v429 = vpop.f32.mrf.mxu0
        %v430 = vpop.f32.mrf.mxu0
        %431 = vdwg.mxu0
        %s432 = scalar_lea.vmem %s1, 32
        %v433 = vld [vmem:[%s432] sm:$0xf]
        %v434 = vld [vmem:[%s432 + $0x4] sm:$0xf]
        %v435 = vld [vmem:[%s432 + $0x8] sm:$0xf]
        %v436 = vld [vmem:[%s432 + $0xc] sm:$0xf]
        %v441 = vunpack.c.l.b16 %v433
        %v442 = vunpack.c.l.b16 %v434
        %v443 = vunpack.c.l.b16 %v435
        %v444 = vunpack.c.l.b16 %v436
        %v445 = vpack.c.b16 %v442, %v441
        %v446 = vpack.c.b16 %v444, %v443
        %449 = vmatprep.subr.bf16.mxu0 0
        %450 = vmatpush1.bf16.msra.mxu0 0
        %451 = vmatprep.subr.bf16.mxu0 0
        %452 = vmatpush1.bf16.msra.mxu0 0
        %453 = vmatprep.subr.bf16.mxu0 0
        %454 = vmatpush1.bf16.msra.mxu0 0
        %455 = vmatprep.subr.bf16.mxu0 0
        %456 = vmatpush1.bf16.msra.mxu0 0
        %457 = vmatprep.subr.bf16.mxu0 0
        %458 = vmatpush1.bf16.msra.mxu0 0
        %459 = vmatprep.subr.bf16.mxu0 0
        %460 = vmatpush1.bf16.msra.mxu0 0
        %461 = vmatprep.subr.bf16.mxu0 0
        %462 = vmatpush1.bf16.msra.mxu0 %v446
        %463 = vmatprep.subr.bf16.mxu0 0
        %464 = vmatpush1.bf16.msra.mxu0 %v445
        %465 = vmatprep.subr.bf16.mxu0 0
        %466 = vmatpush2.bf16.msra.mxu0 0
        %467 = vmatprep.subr.bf16.mxu0 0
        %468 = vmatpush2.bf16.msra.mxu0 0
        %469 = vmatprep.subr.bf16.mxu0 0
        %470 = vmatpush2.bf16.msra.mxu0 0
        %471 = vmatprep.subr.bf16.mxu0 0
        %472 = vmatpush2.bf16.msra.mxu0 0
        %473 = vmatprep.subr.bf16.mxu0 0
        %474 = vmatpush2.bf16.msra.mxu0 0
        %475 = vmatprep.subr.bf16.mxu0 0
        %476 = vmatpush2.bf16.msra.mxu0 0
        %477 = vmatprep.subr.bf16.mxu0 0
        %478 = vmatpush2.bf16.msra.mxu0 0
        %479 = vmatprep.subr.bf16.mxu0 0
        %480 = vmatpush2.bf16.msra.mxu0 0
        %481 = vmatprep.mubr.bf16.mxu0 0
        %482 = vmatmul.mubr.bf16.gmra.mxu0 %v333
        %v483 = vpop.f32.mrf.mxu0
        %v484 = vadd.f32 0.0, %v483
        %v485 = vpop.f32.mrf.mxu0
        %v486 = vpop.f32.mrf.mxu0
        %v487 = vpop.f32.mrf.mxu0
        %488 = vdwg.mxu0
        %s489 = scalar_lea.vmem %s1, 48
        %v490 = vld [vmem:[%s489] sm:$0xf]
        %v491 = vld [vmem:[%s489 + $0x4] sm:$0xf]
        %v492 = vld [vmem:[%s489 + $0x8] sm:$0xf]
        %v493 = vld [vmem:[%s489 + $0xc] sm:$0xf]
        %v498 = vunpack.c.l.b16 %v490
        %v499 = vunpack.c.l.b16 %v491
        %v500 = vunpack.c.l.b16 %v492
        %v501 = vunpack.c.l.b16 %v493
        %v502 = vpack.c.b16 %v499, %v498
        %v503 = vpack.c.b16 %v501, %v500
        %506 = vmatprep.subr.bf16.mxu0 0
        %507 = vmatpush1.bf16.msra.mxu0 0
        %508 = vmatprep.subr.bf16.mxu0 0
        %509 = vmatpush1.bf16.msra.mxu0 0
        %510 = vmatprep.subr.bf16.mxu0 0
        %511 = vmatpush1.bf16.msra.mxu0 0
        %512 = vmatprep.subr.bf16.mxu0 0
        %513 = vmatpush1.bf16.msra.mxu0 0
        %514 = vmatprep.subr.bf16.mxu0 0
        %515 = vmatpush1.bf16.msra.mxu0 0
        %516 = vmatprep.subr.bf16.mxu0 0
        %517 = vmatpush1.bf16.msra.mxu0 0
        %518 = vmatprep.subr.bf16.mxu0 0
        %519 = vmatpush1.bf16.msra.mxu0 %v503
        %520 = vmatprep.subr.bf16.mxu0 0
        %521 = vmatpush1.bf16.msra.mxu0 %v502
        %522 = vmatprep.subr.bf16.mxu0 0
        %523 = vmatpush2.bf16.msra.mxu0 0
        %524 = vmatprep.subr.bf16.mxu0 0
        %525 = vmatpush2.bf16.msra.mxu0 0
        %526 = vmatprep.subr.bf16.mxu0 0
        %527 = vmatpush2.bf16.msra.mxu0 0
        %528 = vmatprep.subr.bf16.mxu0 0
        %529 = vmatpush2.bf16.msra.mxu0 0
        %530 = vmatprep.subr.bf16.mxu0 0
        %531 = vmatpush2.bf16.msra.mxu0 0
        %532 = vmatprep.subr.bf16.mxu0 0
        %533 = vmatpush2.bf16.msra.mxu0 0
        %534 = vmatprep.subr.bf16.mxu0 0
        %535 = vmatpush2.bf16.msra.mxu0 0
        %536 = vmatprep.subr.bf16.mxu0 0
        %537 = vmatpush2.bf16.msra.mxu0 0
        %538 = vmatprep.mubr.bf16.mxu0 0
        %539 = vmatmul.mubr.bf16.gmra.mxu0 %v333
        %v540 = vpop.f32.mrf.mxu0
        %v541 = vadd.f32 0.0, %v540
        %v542 = vpop.f32.mrf.mxu0
        %v543 = vpop.f32.mrf.mxu0
        %v544 = vpop.f32.mrf.mxu0
        %545 = vdwg.mxu0
        %v547 = vrot.slane %v427, 7
        %v550 = vrot.slane %v484, 6
        %v553 = vrot.slane %v541, 5
        %vm555 = vcmask 1040384
        %v556 = vsel %vm555, %v370, %v547
        %vm557 = vcmask 1041408
        %v558 = vsel %vm557, %v556, %v550
        %vm559 = vcmask 1042432
        %v560 = vsel %vm559, %v558, %v553
        %v561 = vld [vmem:[%s2] sm:$0xf]
        %v562 = vadd.f32 %v560, %v561
        %v564 = vrot.slane %v562, 7
        %v566 = vsel %vm555, 0.0, %v564
        %vm567 = vcmask 1044480
        %v568 = vsel %vm567, %v566, 0.0
        %v570 = vrot.slane %v568, 1
        %571 = vrot.lane.b32.xlu0 %v570, 64
        %v572 = vpop.permute.xlu0 %571
        %vm574 = vcmask 523264
        %v575 = vsel %vm574, %v568, %v572
        %v576 = vpack.c.bf16 %v575, %v575
        %v577 = vld [vmem:[%s3] sm:$0xf]
        %v578 = vld [vmem:[%s3 + $0x4] sm:$0xf]
        %v579 = vld [vmem:[%s3 + $0x8] sm:$0xf]
        %v580 = vld [vmem:[%s3 + $0xc] sm:$0xf]
        %v581 = vld [vmem:[%s3 + $0x10] sm:$0xf]
        %v582 = vld [vmem:[%s3 + $0x14] sm:$0xf]
        %v583 = vld [vmem:[%s3 + $0x18] sm:$0xf]
        %v584 = vld [vmem:[%s3 + $0x1c] sm:$0xf]
        %v585 = vld [vmem:[%s3 + $0x20] sm:$0xf]
        %v586 = vld [vmem:[%s3 + $0x24] sm:$0xf]
        %v587 = vld [vmem:[%s3 + $0x28] sm:$0xf]
        %v588 = vld [vmem:[%s3 + $0x2c] sm:$0xf]
        %v589 = vld [vmem:[%s3 + $0x30] sm:$0xf]
        %v590 = vld [vmem:[%s3 + $0x34] sm:$0xf]
        %v591 = vld [vmem:[%s3 + $0x38] sm:$0xf]
        %v592 = vld [vmem:[%s3 + $0x3c] sm:$0xf]
        %v593 = vld [vmem:[%s4] sm:$0x1]
        %v595 = vlaneseq
        %v596 = vshrl.u32 %v595, 7
        %v597 = vsub.s32 0, %v596
        %v598 = vrot.slane %v593, %v597
        %v616 = vunpack.c.l.b16 %v577
        %v617 = vunpack.c.l.b16 %v578
        %v618 = vunpack.c.l.b16 %v579
        %v619 = vunpack.c.l.b16 %v580
        %v620 = vunpack.c.l.b16 %v581
        %v621 = vunpack.c.l.b16 %v582
        %v622 = vunpack.c.l.b16 %v583
        %v623 = vunpack.c.l.b16 %v584
        %v624 = vunpack.c.l.b16 %v585
        %v625 = vunpack.c.l.b16 %v586
        %v626 = vunpack.c.l.b16 %v587
        %v627 = vunpack.c.l.b16 %v588
        %v628 = vunpack.c.l.b16 %v589
        %v629 = vunpack.c.l.b16 %v590
        %v630 = vunpack.c.l.b16 %v591
        %v631 = vunpack.c.l.b16 %v592
        %v632 = vpack.c.b16 %v617, %v616
        %v633 = vpack.c.b16 %v619, %v618
        %v634 = vpack.c.b16 %v621, %v620
        %v635 = vpack.c.b16 %v623, %v622
        %v636 = vpack.c.b16 %v625, %v624
        %v637 = vpack.c.b16 %v627, %v626
        %v638 = vpack.c.b16 %v629, %v628
        %v639 = vpack.c.b16 %v631, %v630
        %648 = vmatprep.subr.bf16.mxu0 0
        %649 = vmatpush1.bf16.msra.mxu0 %v639
        %650 = vmatprep.subr.bf16.mxu0 0
        %651 = vmatpush1.bf16.msra.mxu0 %v638
        %652 = vmatprep.subr.bf16.mxu0 0
        %653 = vmatpush1.bf16.msra.mxu0 %v637
        %654 = vmatprep.subr.bf16.mxu0 0
        %655 = vmatpush1.bf16.msra.mxu0 %v636
        %656 = vmatprep.subr.bf16.mxu0 0
        %657 = vmatpush1.bf16.msra.mxu0 %v635
        %658 = vmatprep.subr.bf16.mxu0 0
        %659 = vmatpush1.bf16.msra.mxu0 %v634
        %660 = vmatprep.subr.bf16.mxu0 0
        %661 = vmatpush1.bf16.msra.mxu0 %v633
        %662 = vmatprep.subr.bf16.mxu0 0
        %663 = vmatpush1.bf16.msra.mxu0 %v632
        %664 = vmatprep.subr.bf16.mxu0 0
        %665 = vmatpush2.bf16.msra.mxu0 0
        %666 = vmatprep.subr.bf16.mxu0 0
        %667 = vmatpush2.bf16.msra.mxu0 0
        %668 = vmatprep.subr.bf16.mxu0 0
        %669 = vmatpush2.bf16.msra.mxu0 0
        %670 = vmatprep.subr.bf16.mxu0 0
        %671 = vmatpush2.bf16.msra.mxu0 0
        %672 = vmatprep.subr.bf16.mxu0 0
        %673 = vmatpush2.bf16.msra.mxu0 0
        %674 = vmatprep.subr.bf16.mxu0 0
        %675 = vmatpush2.bf16.msra.mxu0 0
        %676 = vmatprep.subr.bf16.mxu0 0
        %677 = vmatpush2.bf16.msra.mxu0 0
        %678 = vmatprep.subr.bf16.mxu0 0
        %679 = vmatpush2.bf16.msra.mxu0 0
        %680 = vmatprep.mubr.bf16.mxu0 0
        %681 = vmatmul.mubr.bf16.gmra.mxu0 %v576
        %v682 = vpop.f32.mrf.mxu0
        %v683 = vadd.f32 %v598, %v682
        %v684 = vpop.f32.mrf.mxu0
        %v685 = vpop.f32.mrf.mxu0
        %v686 = vpop.f32.mrf.mxu0
        %687 = vdwg.mxu0
        %s688 = scalar_lea.vmem %s3, 64
        %v689 = vld [vmem:[%s688] sm:$0xf]
        %v690 = vld [vmem:[%s688 + $0x4] sm:$0xf]
        %v691 = vld [vmem:[%s688 + $0x8] sm:$0xf]
        %v692 = vld [vmem:[%s688 + $0xc] sm:$0xf]
        %v693 = vld [vmem:[%s688 + $0x10] sm:$0xf]
        %v694 = vld [vmem:[%s688 + $0x14] sm:$0xf]
        %v695 = vld [vmem:[%s688 + $0x18] sm:$0xf]
        %v696 = vld [vmem:[%s688 + $0x1c] sm:$0xf]
        %v697 = vld [vmem:[%s688 + $0x20] sm:$0xf]
        %v698 = vld [vmem:[%s688 + $0x24] sm:$0xf]
        %v699 = vld [vmem:[%s688 + $0x28] sm:$0xf]
        %v700 = vld [vmem:[%s688 + $0x2c] sm:$0xf]
        %v701 = vld [vmem:[%s688 + $0x30] sm:$0xf]
        %v702 = vld [vmem:[%s688 + $0x34] sm:$0xf]
        %v703 = vld [vmem:[%s688 + $0x38] sm:$0xf]
        %v704 = vld [vmem:[%s688 + $0x3c] sm:$0xf]
        %v706 = vshrl.u32 %v576, 16
        %v708 = vshll.u32 %v576, 16
        %v710 = vrot.slane %v708, 1
        %v711 = vor.u32 %v706, %v710
        %v729 = vunpack.c.l.b16 %v689
        %v730 = vunpack.c.l.b16 %v690
        %v731 = vunpack.c.l.b16 %v691
        %v732 = vunpack.c.l.b16 %v692
        %v733 = vunpack.c.l.b16 %v693
        %v734 = vunpack.c.l.b16 %v694
        %v735 = vunpack.c.l.b16 %v695
        %v736 = vunpack.c.l.b16 %v696
        %v737 = vunpack.c.l.b16 %v697
        %v738 = vunpack.c.l.b16 %v698
        %v739 = vunpack.c.l.b16 %v699
        %v740 = vunpack.c.l.b16 %v700
        %v741 = vunpack.c.l.b16 %v701
        %v742 = vunpack.c.l.b16 %v702
        %v743 = vunpack.c.l.b16 %v703
        %v744 = vunpack.c.l.b16 %v704
        %v745 = vpack.c.b16 %v730, %v729
        %v746 = vpack.c.b16 %v732, %v731
        %v747 = vpack.c.b16 %v734, %v733
        %v748 = vpack.c.b16 %v736, %v735
        %v749 = vpack.c.b16 %v738, %v737
        %v750 = vpack.c.b16 %v740, %v739
        %v751 = vpack.c.b16 %v742, %v741
        %v752 = vpack.c.b16 %v744, %v743
        %761 = vmatprep.subr.bf16.mxu0 0
        %762 = vmatpush1.bf16.msra.mxu0 %v752
        %763 = vmatprep.subr.bf16.mxu0 0
        %764 = vmatpush1.bf16.msra.mxu0 %v751
        %765 = vmatprep.subr.bf16.mxu0 0
        %766 = vmatpush1.bf16.msra.mxu0 %v750
        %767 = vmatprep.subr.bf16.mxu0 0
        %768 = vmatpush1.bf16.msra.mxu0 %v749
        %769 = vmatprep.subr.bf16.mxu0 0
        %770 = vmatpush1.bf16.msra.mxu0 %v748
        %771 = vmatprep.subr.bf16.mxu0 0
        %772 = vmatpush1.bf16.msra.mxu0 %v747
        %773 = vmatprep.subr.bf16.mxu0 0
        %774 = vmatpush1.bf16.msra.mxu0 %v746
        %775 = vmatprep.subr.bf16.mxu0 0
        %776 = vmatpush1.bf16.msra.mxu0 %v745
        %777 = vmatprep.subr.bf16.mxu0 0
        %778 = vmatpush2.bf16.msra.mxu0 0
        %779 = vmatprep.subr.bf16.mxu0 0
        %780 = vmatpush2.bf16.msra.mxu0 0
        %781 = vmatprep.subr.bf16.mxu0 0
        %782 = vmatpush2.bf16.msra.mxu0 0
        %783 = vmatprep.subr.bf16.mxu0 0
        %784 = vmatpush2.bf16.msra.mxu0 0
        %785 = vmatprep.subr.bf16.mxu0 0
        %786 = vmatpush2.bf16.msra.mxu0 0
        %787 = vmatprep.subr.bf16.mxu0 0
        %788 = vmatpush2.bf16.msra.mxu0 0
        %789 = vmatprep.subr.bf16.mxu0 0
        %790 = vmatpush2.bf16.msra.mxu0 0
        %791 = vmatprep.subr.bf16.mxu0 0
        %792 = vmatpush2.bf16.msra.mxu0 0
        %793 = vmatprep.mubr.bf16.mxu0 0
        %794 = vmatmul.mubr.bf16.gmra.mxu0 %v711
        %v795 = vpop.f32.mrf.mxu0
        %v796 = vadd.f32 %v598, %v795
        %v797 = vpop.f32.mrf.mxu0
        %v798 = vpop.f32.mrf.mxu0
        %v799 = vpop.f32.mrf.mxu0
        %800 = vdwg.mxu0
        %v803 = vunpack.c.l.s4 1966171168
        %v804 = vunpack.c.0.s8 %v803
        %v805 = vlaneseq
        %v806 = vshrl.u32 %v805, 7
        %v807 = vsub.s32 %v804, %v806
        %v808 = vrot.slane %v683, %v807
        %v809 = vcombine.high %v808, %v808
        %v811 = vunpack.c.l.s4 1966171168
        %v812 = vunpack.c.0.s8 %v811
        %v813 = vlaneseq
        %v814 = vshrl.u32 %v813, 7
        %v815 = vsub.s32 %v812, %v814
        %v816 = vrot.slane %v808, %v815
        %v818 = vunpack.c.l.s4 1966171168
        %v819 = vunpack.c.0.s8 %v818
        %v820 = vlaneseq
        %v821 = vshrl.u32 %v820, 7
        %v822 = vsub.s32 %v819, %v821
        %v823 = vrot.slane %v809, %v822
        %v824 = vcombine.high %v816, %v816
        %v825 = vcombine.high %v823, %v823
        %v832 = vunpack.c.l.s4 1966171168
        %v833 = vunpack.c.0.s8 %v832
        %v834 = vlaneseq
        %v835 = vshrl.u32 %v834, 7
        %v836 = vsub.s32 %v833, %v835
        %v837 = vrot.slane %v796, %v836
        %v838 = vcombine.high %v837, %v837
        %v840 = vunpack.c.l.s4 1966171168
        %v841 = vunpack.c.0.s8 %v840
        %v842 = vlaneseq
        %v843 = vshrl.u32 %v842, 7
        %v844 = vsub.s32 %v841, %v843
        %v845 = vrot.slane %v837, %v844
        %v847 = vunpack.c.l.s4 1966171168
        %v848 = vunpack.c.0.s8 %v847
        %v849 = vlaneseq
        %v850 = vshrl.u32 %v849, 7
        %v851 = vsub.s32 %v848, %v850
        %v852 = vrot.slane %v838, %v851
        %v853 = vcombine.high %v845, %v845
        %v854 = vcombine.high %v852, %v852
        %v855 = vlaneseq
        %v856 = vshrl.u32 %v855, 7
        %v857 = vsub.s32 0, %v856
        %v858 = vrot.slane %v845, %v857
        %v859 = vlaneseq
        %v860 = vshrl.u32 %v859, 7
        %v861 = vsub.s32 0, %v860
        %v862 = vrot.slane %v852, %v861
        %v863 = vlaneseq
        %v864 = vshrl.u32 %v863, 7
        %v865 = vsub.s32 0, %v864
        %v866 = vrot.slane %v853, %v865
        %v867 = vlaneseq
        %v868 = vshrl.u32 %v867, 7
        %v869 = vsub.s32 0, %v868
        %v870 = vrot.slane %v854, %v869
        %v875 = vsel %vm555, %v816, %v858
        %v876 = vsel %vm555, %v823, %v862
        %v877 = vsel %vm555, %v824, %v866
        %v878 = vsel %vm555, %v825, %v870
        %v879 = vmax.f32 %v875, 0.0
        %v880 = vmax.f32 %v876, 0.0
        %v881 = vmax.f32 %v877, 0.0
        %v882 = vmax.f32 %v878, 0.0
        %v887 = vcombine.low %v879, %v880
        %v888 = vcombine.low %v881, %v882
        %v890 = vunpack.c.l.s4 1983009808
        %v891 = vunpack.c.0.s8 %v890
        %v892 = vlaneseq
        %v893 = vshrl.u32 %v892, 7
        %v894 = vsub.s32 %v891, %v893
        %v895 = vrot.slane %v887, %v894
        %v897 = vunpack.c.l.s4 1983009808
        %v898 = vunpack.c.0.s8 %v897
        %v899 = vlaneseq
        %v900 = vshrl.u32 %v899, 7
        %v901 = vsub.s32 %v898, %v900
        %v902 = vrot.slane %v888, %v901
        %v903 = vcombine.low %v895, %v902
        %v904 = vrot.slane %v903, 7
        %v906 = vsel %vm555, 0.0, %v904
        %v907 = vsel %vm555, %v904, 0.0
        %vm910 = vcmask 1046528
        %v911 = vrot.slane %v906, 1
        %v912 = vrot.slane %v907, 1
        %v913 = vsel %vm910, %v911, %v912
        %914 = vrot.lane.b32.xlu0 %v913, 64
        %v915 = vpop.permute.xlu0 %914
        %v917 = vsel %vm574, %v906, %v915
        %v918 = vpack.c.bf16 %v917, %v917
        %v919 = vld [vmem:[%s5] sm:$0xf]
        %v920 = vld [vmem:[%s5 + $0x4] sm:$0xf]
        %v921 = vld [vmem:[%s5 + $0x8] sm:$0xf]
        %v922 = vld [vmem:[%s5 + $0xc] sm:$0xf]
        %v923 = vld [vmem:[%s5 + $0x10] sm:$0xf]
        %v924 = vld [vmem:[%s5 + $0x14] sm:$0xf]
        %v925 = vld [vmem:[%s5 + $0x18] sm:$0xf]
        %v926 = vld [vmem:[%s5 + $0x1c] sm:$0xf]
        %v927 = vld [vmem:[%s5 + $0x20] sm:$0xf]
        %v928 = vld [vmem:[%s5 + $0x24] sm:$0xf]
        %v929 = vld [vmem:[%s5 + $0x28] sm:$0xf]
        %v930 = vld [vmem:[%s5 + $0x2c] sm:$0xf]
        %v931 = vld [vmem:[%s5 + $0x30] sm:$0xf]
        %v932 = vld [vmem:[%s5 + $0x34] sm:$0xf]
        %v933 = vld [vmem:[%s5 + $0x38] sm:$0xf]
        %v934 = vld [vmem:[%s5 + $0x3c] sm:$0xf]
        %v935 = vld [vmem:[%s6] sm:$0x1]
        %v937 = vlaneseq
        %v938 = vshrl.u32 %v937, 7
        %v939 = vsub.s32 0, %v938
        %v940 = vrot.slane %v935, %v939
        %v958 = vunpack.c.l.b16 %v919
        %v959 = vunpack.c.l.b16 %v920
        %v960 = vunpack.c.l.b16 %v921
        %v961 = vunpack.c.l.b16 %v922
        %v962 = vunpack.c.l.b16 %v923
        %v963 = vunpack.c.l.b16 %v924
        %v964 = vunpack.c.l.b16 %v925
        %v965 = vunpack.c.l.b16 %v926
        %v966 = vunpack.c.l.b16 %v927
        %v967 = vunpack.c.l.b16 %v928
        %v968 = vunpack.c.l.b16 %v929
        %v969 = vunpack.c.l.b16 %v930
        %v970 = vunpack.c.l.b16 %v931
        %v971 = vunpack.c.l.b16 %v932
        %v972 = vunpack.c.l.b16 %v933
        %v973 = vunpack.c.l.b16 %v934
        %v974 = vpack.c.b16 %v959, %v958
        %v975 = vpack.c.b16 %v961, %v960
        %v976 = vpack.c.b16 %v963, %v962
        %v977 = vpack.c.b16 %v965, %v964
        %v978 = vpack.c.b16 %v967, %v966
        %v979 = vpack.c.b16 %v969, %v968
        %v980 = vpack.c.b16 %v971, %v970
        %v981 = vpack.c.b16 %v973, %v972
        %990 = vmatprep.subr.bf16.mxu0 0
        %991 = vmatpush1.bf16.msra.mxu0 %v981
        %992 = vmatprep.subr.bf16.mxu0 0
        %993 = vmatpush1.bf16.msra.mxu0 %v980
        %994 = vmatprep.subr.bf16.mxu0 0
        %995 = vmatpush1.bf16.msra.mxu0 %v979
        %996 = vmatprep.subr.bf16.mxu0 0
        %997 = vmatpush1.bf16.msra.mxu0 %v978
        %998 = vmatprep.subr.bf16.mxu0 0
        %999 = vmatpush1.bf16.msra.mxu0 %v977
        %1000 = vmatprep.subr.bf16.mxu0 0
        %1001 = vmatpush1.bf16.msra.mxu0 %v976
        %1002 = vmatprep.subr.bf16.mxu0 0
        %1003 = vmatpush1.bf16.msra.mxu0 %v975
        %1004 = vmatprep.subr.bf16.mxu0 0
        %1005 = vmatpush1.bf16.msra.mxu0 %v974
        %1006 = vmatprep.subr.bf16.mxu0 0
        %1007 = vmatpush2.bf16.msra.mxu0 0
        %1008 = vmatprep.subr.bf16.mxu0 0
        %1009 = vmatpush2.bf16.msra.mxu0 0
        %1010 = vmatprep.subr.bf16.mxu0 0
        %1011 = vmatpush2.bf16.msra.mxu0 0
        %1012 = vmatprep.subr.bf16.mxu0 0
        %1013 = vmatpush2.bf16.msra.mxu0 0
        %1014 = vmatprep.subr.bf16.mxu0 0
        %1015 = vmatpush2.bf16.msra.mxu0 0
        %1016 = vmatprep.subr.bf16.mxu0 0
        %1017 = vmatpush2.bf16.msra.mxu0 0
        %1018 = vmatprep.subr.bf16.mxu0 0
        %1019 = vmatpush2.bf16.msra.mxu0 0
        %1020 = vmatprep.subr.bf16.mxu0 0
        %1021 = vmatpush2.bf16.msra.mxu0 0
        %1022 = vmatprep.mubr.bf16.mxu0 0
        %1023 = vmatmul.mubr.bf16.gmra.mxu0 %v918
        %v1024 = vpop.f32.mrf.mxu0
        %v1025 = vadd.f32 %v940, %v1024
        %v1026 = vpop.f32.mrf.mxu0
        %v1027 = vpop.f32.mrf.mxu0
        %v1028 = vpop.f32.mrf.mxu0
        %1029 = vdwg.mxu0
        %1030 = vrot.lane.b32.xlu0 %v912, 64
        %v1031 = vpop.permute.xlu0 %1030
        %v1033 = vsel %vm574, %v907, %v1031
        %v1034 = vpack.c.bf16 %v1033, %v917
        %s1035 = scalar_lea.vmem %s5, 64
        %v1036 = vld [vmem:[%s1035] sm:$0xf]
        %v1037 = vld [vmem:[%s1035 + $0x4] sm:$0xf]
        %v1038 = vld [vmem:[%s1035 + $0x8] sm:$0xf]
        %v1039 = vld [vmem:[%s1035 + $0xc] sm:$0xf]
        %v1040 = vld [vmem:[%s1035 + $0x10] sm:$0xf]
        %v1041 = vld [vmem:[%s1035 + $0x14] sm:$0xf]
        %v1042 = vld [vmem:[%s1035 + $0x18] sm:$0xf]
        %v1043 = vld [vmem:[%s1035 + $0x1c] sm:$0xf]
        %v1044 = vld [vmem:[%s1035 + $0x20] sm:$0xf]
        %v1045 = vld [vmem:[%s1035 + $0x24] sm:$0xf]
        %v1046 = vld [vmem:[%s1035 + $0x28] sm:$0xf]
        %v1047 = vld [vmem:[%s1035 + $0x2c] sm:$0xf]
        %v1048 = vld [vmem:[%s1035 + $0x30] sm:$0xf]
        %v1049 = vld [vmem:[%s1035 + $0x34] sm:$0xf]
        %v1050 = vld [vmem:[%s1035 + $0x38] sm:$0xf]
        %v1051 = vld [vmem:[%s1035 + $0x3c] sm:$0xf]
        %v1053 = vshrl.u32 %v1034, 16
        %v1055 = vshll.u32 %v1034, 16
        %v1057 = vrot.slane %v1055, 1
        %v1058 = vor.u32 %v1053, %v1057
        %v1076 = vunpack.c.l.b16 %v1036
        %v1077 = vunpack.c.l.b16 %v1037
        %v1078 = vunpack.c.l.b16 %v1038
        %v1079 = vunpack.c.l.b16 %v1039
        %v1080 = vunpack.c.l.b16 %v1040
        %v1081 = vunpack.c.l.b16 %v1041
        %v1082 = vunpack.c.l.b16 %v1042
        %v1083 = vunpack.c.l.b16 %v1043
        %v1084 = vunpack.c.l.b16 %v1044
        %v1085 = vunpack.c.l.b16 %v1045
        %v1086 = vunpack.c.l.b16 %v1046
        %v1087 = vunpack.c.l.b16 %v1047
        %v1088 = vunpack.c.l.b16 %v1048
        %v1089 = vunpack.c.l.b16 %v1049
        %v1090 = vunpack.c.l.b16 %v1050
        %v1091 = vunpack.c.l.b16 %v1051
        %v1092 = vpack.c.b16 %v1077, %v1076
        %v1093 = vpack.c.b16 %v1079, %v1078
        %v1094 = vpack.c.b16 %v1081, %v1080
        %v1095 = vpack.c.b16 %v1083, %v1082
        %v1096 = vpack.c.b16 %v1085, %v1084
        %v1097 = vpack.c.b16 %v1087, %v1086
        %v1098 = vpack.c.b16 %v1089, %v1088
        %v1099 = vpack.c.b16 %v1091, %v1090
        %1108 = vmatprep.subr.bf16.mxu0 0
        %1109 = vmatpush1.bf16.msra.mxu0 %v1099
        %1110 = vmatprep.subr.bf16.mxu0 0
        %1111 = vmatpush1.bf16.msra.mxu0 %v1098
        %1112 = vmatprep.subr.bf16.mxu0 0
        %1113 = vmatpush1.bf16.msra.mxu0 %v1097
        %1114 = vmatprep.subr.bf16.mxu0 0
        %1115 = vmatpush1.bf16.msra.mxu0 %v1096
        %1116 = vmatprep.subr.bf16.mxu0 0
        %1117 = vmatpush1.bf16.msra.mxu0 %v1095
        %1118 = vmatprep.subr.bf16.mxu0 0
        %1119 = vmatpush1.bf16.msra.mxu0 %v1094
        %1120 = vmatprep.subr.bf16.mxu0 0
        %1121 = vmatpush1.bf16.msra.mxu0 %v1093
        %1122 = vmatprep.subr.bf16.mxu0 0
        %1123 = vmatpush1.bf16.msra.mxu0 %v1092
        %1124 = vmatprep.subr.bf16.mxu0 0
        %1125 = vmatpush2.bf16.msra.mxu0 0
        %1126 = vmatprep.subr.bf16.mxu0 0
        %1127 = vmatpush2.bf16.msra.mxu0 0
        %1128 = vmatprep.subr.bf16.mxu0 0
        %1129 = vmatpush2.bf16.msra.mxu0 0
        %1130 = vmatprep.subr.bf16.mxu0 0
        %1131 = vmatpush2.bf16.msra.mxu0 0
        %1132 = vmatprep.subr.bf16.mxu0 0
        %1133 = vmatpush2.bf16.msra.mxu0 0
        %1134 = vmatprep.subr.bf16.mxu0 0
        %1135 = vmatpush2.bf16.msra.mxu0 0
        %1136 = vmatprep.subr.bf16.mxu0 0
        %1137 = vmatpush2.bf16.msra.mxu0 0
        %1138 = vmatprep.subr.bf16.mxu0 0
        %1139 = vmatpush2.bf16.msra.mxu0 0
        %1140 = vmatprep.mubr.bf16.mxu0 0
        %1141 = vmatmul.mubr.bf16.gmra.mxu0 %v1058
        %v1142 = vpop.f32.mrf.mxu0
        %v1143 = vadd.f32 %v940, %v1142
        %v1144 = vpop.f32.mrf.mxu0
        %v1145 = vpop.f32.mrf.mxu0
        %v1146 = vpop.f32.mrf.mxu0
        %1147 = vdwg.mxu0
        %v1149 = vcombine.high %v1025, %v1025
        %v1151 = vunpack.c.l.s4 1966171168
        %v1152 = vunpack.c.0.s8 %v1151
        %v1153 = vlaneseq
        %v1154 = vshrl.u32 %v1153, 7
        %v1155 = vsub.s32 %v1152, %v1154
        %v1156 = vrot.slane %v1025, %v1155
        %v1158 = vunpack.c.l.s4 1966171168
        %v1159 = vunpack.c.0.s8 %v1158
        %v1160 = vlaneseq
        %v1161 = vshrl.u32 %v1160, 7
        %v1162 = vsub.s32 %v1159, %v1161
        %v1163 = vrot.slane %v1149, %v1162
        %v1164 = vcombine.high %v1156, %v1156
        %v1165 = vcombine.high %v1163, %v1163
        %v1167 = vunpack.c.l.s4 1966171168
        %v1168 = vunpack.c.0.s8 %v1167
        %v1169 = vlaneseq
        %v1170 = vshrl.u32 %v1169, 7
        %v1171 = vsub.s32 %v1168, %v1170
        %v1172 = vrot.slane %v1156, %v1171
        %v1174 = vunpack.c.l.s4 1966171168
        %v1175 = vunpack.c.0.s8 %v1174
        %v1176 = vlaneseq
        %v1177 = vshrl.u32 %v1176, 7
        %v1178 = vsub.s32 %v1175, %v1177
        %v1179 = vrot.slane %v1163, %v1178
        %v1181 = vunpack.c.l.s4 1966171168
        %v1182 = vunpack.c.0.s8 %v1181
        %v1183 = vlaneseq
        %v1184 = vshrl.u32 %v1183, 7
        %v1185 = vsub.s32 %v1182, %v1184
        %v1186 = vrot.slane %v1164, %v1185
        %v1188 = vunpack.c.l.s4 1966171168
        %v1189 = vunpack.c.0.s8 %v1188
        %v1190 = vlaneseq
        %v1191 = vshrl.u32 %v1190, 7
        %v1192 = vsub.s32 %v1189, %v1191
        %v1193 = vrot.slane %v1165, %v1192
        %v1194 = vcombine.high %v1172, %v1172
        %v1195 = vcombine.high %v1179, %v1179
        %v1196 = vcombine.high %v1186, %v1186
        %v1197 = vcombine.high %v1193, %v1193
        %v1207 = vcombine.high %v1143, %v1143
        %v1209 = vunpack.c.l.s4 1966171168
        %v1210 = vunpack.c.0.s8 %v1209
        %v1211 = vlaneseq
        %v1212 = vshrl.u32 %v1211, 7
        %v1213 = vsub.s32 %v1210, %v1212
        %v1214 = vrot.slane %v1143, %v1213
        %v1216 = vunpack.c.l.s4 1966171168
        %v1217 = vunpack.c.0.s8 %v1216
        %v1218 = vlaneseq
        %v1219 = vshrl.u32 %v1218, 7
        %v1220 = vsub.s32 %v1217, %v1219
        %v1221 = vrot.slane %v1207, %v1220
        %v1222 = vcombine.high %v1214, %v1214
        %v1223 = vcombine.high %v1221, %v1221
        %v1225 = vunpack.c.l.s4 1966171168
        %v1226 = vunpack.c.0.s8 %v1225
        %v1227 = vlaneseq
        %v1228 = vshrl.u32 %v1227, 7
        %v1229 = vsub.s32 %v1226, %v1228
        %v1230 = vrot.slane %v1214, %v1229
        %v1232 = vunpack.c.l.s4 1966171168
        %v1233 = vunpack.c.0.s8 %v1232
        %v1234 = vlaneseq
        %v1235 = vshrl.u32 %v1234, 7
        %v1236 = vsub.s32 %v1233, %v1235
        %v1237 = vrot.slane %v1221, %v1236
        %v1239 = vunpack.c.l.s4 1966171168
        %v1240 = vunpack.c.0.s8 %v1239
        %v1241 = vlaneseq
        %v1242 = vshrl.u32 %v1241, 7
        %v1243 = vsub.s32 %v1240, %v1242
        %v1244 = vrot.slane %v1222, %v1243
        %v1246 = vunpack.c.l.s4 1966171168
        %v1247 = vunpack.c.0.s8 %v1246
        %v1248 = vlaneseq
        %v1249 = vshrl.u32 %v1248, 7
        %v1250 = vsub.s32 %v1247, %v1249
        %v1251 = vrot.slane %v1223, %v1250
        %v1252 = vcombine.high %v1230, %v1230
        %v1253 = vcombine.high %v1237, %v1237
        %v1254 = vcombine.high %v1244, %v1244
        %v1255 = vcombine.high %v1251, %v1251
        %v1256 = vlaneseq
        %v1257 = vshrl.u32 %v1256, 7
        %v1258 = vsub.s32 0, %v1257
        %v1259 = vrot.slane %v1230, %v1258
        %v1260 = vlaneseq
        %v1261 = vshrl.u32 %v1260, 7
        %v1262 = vsub.s32 0, %v1261
        %v1263 = vrot.slane %v1244, %v1262
        %v1264 = vlaneseq
        %v1265 = vshrl.u32 %v1264, 7
        %v1266 = vsub.s32 0, %v1265
        %v1267 = vrot.slane %v1252, %v1266
        %v1268 = vlaneseq
        %v1269 = vshrl.u32 %v1268, 7
        %v1270 = vsub.s32 0, %v1269
        %v1271 = vrot.slane %v1254, %v1270
        %v1272 = vlaneseq
        %v1273 = vshrl.u32 %v1272, 7
        %v1274 = vsub.s32 0, %v1273
        %v1275 = vrot.slane %v1237, %v1274
        %v1276 = vlaneseq
        %v1277 = vshrl.u32 %v1276, 7
        %v1278 = vsub.s32 0, %v1277
        %v1279 = vrot.slane %v1251, %v1278
        %v1280 = vlaneseq
        %v1281 = vshrl.u32 %v1280, 7
        %v1282 = vsub.s32 0, %v1281
        %v1283 = vrot.slane %v1253, %v1282
        %v1284 = vlaneseq
        %v1285 = vshrl.u32 %v1284, 7
        %v1286 = vsub.s32 0, %v1285
        %v1287 = vrot.slane %v1255, %v1286
        %v1296 = vsel %vm555, %v1172, %v1259
        %v1297 = vsel %vm555, %v1186, %v1263
        %v1298 = vsel %vm555, %v1194, %v1267
        %v1299 = vsel %vm555, %v1196, %v1271
        %v1300 = vsel %vm555, %v1179, %v1275
        %v1301 = vsel %vm555, %v1193, %v1279
        %v1302 = vsel %vm555, %v1195, %v1283
        %v1303 = vsel %vm555, %v1197, %v1287
        %v1304 = vmax.f32 %v1296, 0.0
        %v1305 = vmax.f32 %v1297, 0.0
        %v1306 = vmax.f32 %v1298, 0.0
        %v1307 = vmax.f32 %v1299, 0.0
        %v1308 = vmax.f32 %v1300, 0.0
        %v1309 = vmax.f32 %v1301, 0.0
        %v1310 = vmax.f32 %v1302, 0.0
        %v1311 = vmax.f32 %v1303, 0.0
        %v1320 = vcombine.low %v1304, %v1305
        %v1321 = vcombine.low %v1306, %v1307
        %v1323 = vunpack.c.l.s4 1983009808
        %v1324 = vunpack.c.0.s8 %v1323
        %v1325 = vlaneseq
        %v1326 = vshrl.u32 %v1325, 7
        %v1327 = vsub.s32 %v1324, %v1326
        %v1328 = vrot.slane %v1320, %v1327
        %v1330 = vunpack.c.l.s4 1983009808
        %v1331 = vunpack.c.0.s8 %v1330
        %v1332 = vlaneseq
        %v1333 = vshrl.u32 %v1332, 7
        %v1334 = vsub.s32 %v1331, %v1333
        %v1335 = vrot.slane %v1321, %v1334
        %v1336 = vcombine.low %v1328, %v1335
        %v1337 = vcombine.low %v1308, %v1309
        %v1338 = vcombine.low %v1310, %v1311
        %v1340 = vunpack.c.l.s4 1983009808
        %v1341 = vunpack.c.0.s8 %v1340
        %v1342 = vlaneseq
        %v1343 = vshrl.u32 %v1342, 7
        %v1344 = vsub.s32 %v1341, %v1343
        %v1345 = vrot.slane %v1337, %v1344
        %v1347 = vunpack.c.l.s4 1983009808
        %v1348 = vunpack.c.0.s8 %v1347
        %v1349 = vlaneseq
        %v1350 = vshrl.u32 %v1349, 7
        %v1351 = vsub.s32 %v1348, %v1350
        %v1352 = vrot.slane %v1338, %v1351
        %v1353 = vcombine.low %v1345, %v1352
        %v1354 = vrot.slane %v1336, 7
        %v1355 = vrot.slane %v1353, 7
        %v1356 = vsel %vm555, %v1354, %v1355
        %v1360 = vsel %vm555, 0.0, %v1354
        %v1361 = vsel %vm555, %v1355, 0.0
        %v1364 = vrot.slane %v1360, 1
        %v1365 = vrot.slane %v1356, 1
        %v1366 = vsel %vm910, %v1364, %v1365
        %v1367 = vrot.slane %v1361, 1
        %v1368 = vsel %vm910, %v1365, %v1367
        %1369 = vrot.lane.b32.xlu0 %v1366, 64
        %v1370 = vpop.permute.xlu0 %1369
        %1371 = vrot.lane.b32.xlu0 %v1368, 64
        %v1372 = vpop.permute.xlu0 %1371
        %v1375 = vsel %vm574, %v1360, %v1370
        %v1376 = vsel %vm574, %v1356, %v1372
        %v1377 = vpack.c.bf16 %v1376, %v1375
        %v1378 = vld [vmem:[%s7] sm:$0xf]
        %v1379 = vld [vmem:[%s7 + $0x4] sm:$0xf]
        %v1380 = vld [vmem:[%s7 + $0x8] sm:$0xf]
        %v1381 = vld [vmem:[%s7 + $0xc] sm:$0xf]
        %v1382 = vld [vmem:[%s7 + $0x10] sm:$0xf]
        %v1383 = vld [vmem:[%s7 + $0x14] sm:$0xf]
        %v1384 = vld [vmem:[%s7 + $0x18] sm:$0xf]
        %v1385 = vld [vmem:[%s7 + $0x1c] sm:$0xf]
        %v1386 = vld [vmem:[%s7 + $0x20] sm:$0xf]
        %v1387 = vld [vmem:[%s7 + $0x24] sm:$0xf]
        %v1388 = vld [vmem:[%s7 + $0x28] sm:$0xf]
        %v1389 = vld [vmem:[%s7 + $0x2c] sm:$0xf]
        %v1390 = vld [vmem:[%s7 + $0x30] sm:$0xf]
        %v1391 = vld [vmem:[%s7 + $0x34] sm:$0xf]
        %v1392 = vld [vmem:[%s7 + $0x38] sm:$0xf]
        %v1393 = vld [vmem:[%s7 + $0x3c] sm:$0xf]
        %v1394 = vld [vmem:[%s8] sm:$0x1]
        %v1396 = vlaneseq
        %v1397 = vshrl.u32 %v1396, 7
        %v1398 = vsub.s32 0, %v1397
        %v1399 = vrot.slane %v1394, %v1398
        %v1417 = vunpack.c.l.b16 %v1378
        %v1418 = vunpack.c.l.b16 %v1379
        %v1419 = vunpack.c.l.b16 %v1380
        %v1420 = vunpack.c.l.b16 %v1381
        %v1421 = vunpack.c.l.b16 %v1382
        %v1422 = vunpack.c.l.b16 %v1383
        %v1423 = vunpack.c.l.b16 %v1384
        %v1424 = vunpack.c.l.b16 %v1385
        %v1425 = vunpack.c.l.b16 %v1386
        %v1426 = vunpack.c.l.b16 %v1387
        %v1427 = vunpack.c.l.b16 %v1388
        %v1428 = vunpack.c.l.b16 %v1389
        %v1429 = vunpack.c.l.b16 %v1390
        %v1430 = vunpack.c.l.b16 %v1391
        %v1431 = vunpack.c.l.b16 %v1392
        %v1432 = vunpack.c.l.b16 %v1393
        %v1433 = vpack.c.b16 %v1418, %v1417
        %v1434 = vpack.c.b16 %v1420, %v1419
        %v1435 = vpack.c.b16 %v1422, %v1421
        %v1436 = vpack.c.b16 %v1424, %v1423
        %v1437 = vpack.c.b16 %v1426, %v1425
        %v1438 = vpack.c.b16 %v1428, %v1427
        %v1439 = vpack.c.b16 %v1430, %v1429
        %v1440 = vpack.c.b16 %v1432, %v1431
        %1449 = vmatprep.subr.bf16.mxu0 0
        %1450 = vmatpush1.bf16.msra.mxu0 %v1440
        %1451 = vmatprep.subr.bf16.mxu0 0
        %1452 = vmatpush1.bf16.msra.mxu0 %v1439
        %1453 = vmatprep.subr.bf16.mxu0 0
        %1454 = vmatpush1.bf16.msra.mxu0 %v1438
        %1455 = vmatprep.subr.bf16.mxu0 0
        %1456 = vmatpush1.bf16.msra.mxu0 %v1437
        %1457 = vmatprep.subr.bf16.mxu0 0
        %1458 = vmatpush1.bf16.msra.mxu0 %v1436
        %1459 = vmatprep.subr.bf16.mxu0 0
        %1460 = vmatpush1.bf16.msra.mxu0 %v1435
        %1461 = vmatprep.subr.bf16.mxu0 0
        %1462 = vmatpush1.bf16.msra.mxu0 %v1434
        %1463 = vmatprep.subr.bf16.mxu0 0
        %1464 = vmatpush1.bf16.msra.mxu0 %v1433
        %1465 = vmatprep.subr.bf16.mxu0 0
        %1466 = vmatpush2.bf16.msra.mxu0 0
        %1467 = vmatprep.subr.bf16.mxu0 0
        %1468 = vmatpush2.bf16.msra.mxu0 0
        %1469 = vmatprep.subr.bf16.mxu0 0
        %1470 = vmatpush2.bf16.msra.mxu0 0
        %1471 = vmatprep.subr.bf16.mxu0 0
        %1472 = vmatpush2.bf16.msra.mxu0 0
        %1473 = vmatprep.subr.bf16.mxu0 0
        %1474 = vmatpush2.bf16.msra.mxu0 0
        %1475 = vmatprep.subr.bf16.mxu0 0
        %1476 = vmatpush2.bf16.msra.mxu0 0
        %1477 = vmatprep.subr.bf16.mxu0 0
        %1478 = vmatpush2.bf16.msra.mxu0 0
        %1479 = vmatprep.subr.bf16.mxu0 0
        %1480 = vmatpush2.bf16.msra.mxu0 0
        %1481 = vmatprep.mubr.bf16.mxu0 0
        %1482 = vmatmul.mubr.bf16.gmra.mxu0 %v1377
        %v1483 = vpop.f32.mrf.mxu0
        %v1484 = vadd.f32 %v1399, %v1483
        %v1485 = vpop.f32.mrf.mxu0
        %v1486 = vpop.f32.mrf.mxu0
        %v1487 = vadd.f32 %v1399, %v1486
        %v1488 = vpop.f32.mrf.mxu0
        %1489 = vdwg.mxu0
        %1490 = vrot.lane.b32.xlu0 %v1367, 64
        %v1491 = vpop.permute.xlu0 %1490
        %v1493 = vsel %vm574, %v1361, %v1491
        %v1494 = vpack.c.bf16 %v1493, %v1493
        %s1495 = scalar_lea.vmem %s7, 64
        %v1496 = vld [vmem:[%s1495] sm:$0xf]
        %v1497 = vld [vmem:[%s1495 + $0x4] sm:$0xf]
        %v1498 = vld [vmem:[%s1495 + $0x8] sm:$0xf]
        %v1499 = vld [vmem:[%s1495 + $0xc] sm:$0xf]
        %v1500 = vld [vmem:[%s1495 + $0x10] sm:$0xf]
        %v1501 = vld [vmem:[%s1495 + $0x14] sm:$0xf]
        %v1502 = vld [vmem:[%s1495 + $0x18] sm:$0xf]
        %v1503 = vld [vmem:[%s1495 + $0x1c] sm:$0xf]
        %v1504 = vld [vmem:[%s1495 + $0x20] sm:$0xf]
        %v1505 = vld [vmem:[%s1495 + $0x24] sm:$0xf]
        %v1506 = vld [vmem:[%s1495 + $0x28] sm:$0xf]
        %v1507 = vld [vmem:[%s1495 + $0x2c] sm:$0xf]
        %v1508 = vld [vmem:[%s1495 + $0x30] sm:$0xf]
        %v1509 = vld [vmem:[%s1495 + $0x34] sm:$0xf]
        %v1510 = vld [vmem:[%s1495 + $0x38] sm:$0xf]
        %v1511 = vld [vmem:[%s1495 + $0x3c] sm:$0xf]
        %vm1512 = vsmask.f32 7424
        %v1514 = vshrl.u32 %v1377, 16
        %v1516 = vshll.u32 %v1377, 16
        %v1518 = vrot.slane %v1516, 1
        %v1519 = vor.u32 %v1514, %v1518
        %v1521 = vshll.u32 %v1494, 16
        %v1523 = vrot.slane %v1521, 1
        %v1524 = vsel %vm1512, %v1519, %v1523
        %v1542 = vunpack.c.l.b16 %v1496
        %v1543 = vunpack.c.l.b16 %v1497
        %v1544 = vunpack.c.l.b16 %v1498
        %v1545 = vunpack.c.l.b16 %v1499
        %v1546 = vunpack.c.l.b16 %v1500
        %v1547 = vunpack.c.l.b16 %v1501
        %v1548 = vunpack.c.l.b16 %v1502
        %v1549 = vunpack.c.l.b16 %v1503
        %v1550 = vunpack.c.l.b16 %v1504
        %v1551 = vunpack.c.l.b16 %v1505
        %v1552 = vunpack.c.l.b16 %v1506
        %v1553 = vunpack.c.l.b16 %v1507
        %v1554 = vunpack.c.l.b16 %v1508
        %v1555 = vunpack.c.l.b16 %v1509
        %v1556 = vunpack.c.l.b16 %v1510
        %v1557 = vunpack.c.l.b16 %v1511
        %v1558 = vpack.c.b16 %v1543, %v1542
        %v1559 = vpack.c.b16 %v1545, %v1544
        %v1560 = vpack.c.b16 %v1547, %v1546
        %v1561 = vpack.c.b16 %v1549, %v1548
        %v1562 = vpack.c.b16 %v1551, %v1550
        %v1563 = vpack.c.b16 %v1553, %v1552
        %v1564 = vpack.c.b16 %v1555, %v1554
        %v1565 = vpack.c.b16 %v1557, %v1556
        %1574 = vmatprep.subr.bf16.mxu0 0
        %1575 = vmatpush1.bf16.msra.mxu0 %v1565
        %1576 = vmatprep.subr.bf16.mxu0 0
        %1577 = vmatpush1.bf16.msra.mxu0 %v1564
        %1578 = vmatprep.subr.bf16.mxu0 0
        %1579 = vmatpush1.bf16.msra.mxu0 %v1563
        %1580 = vmatprep.subr.bf16.mxu0 0
        %1581 = vmatpush1.bf16.msra.mxu0 %v1562
        %1582 = vmatprep.subr.bf16.mxu0 0
        %1583 = vmatpush1.bf16.msra.mxu0 %v1561
        %1584 = vmatprep.subr.bf16.mxu0 0
        %1585 = vmatpush1.bf16.msra.mxu0 %v1560
        %1586 = vmatprep.subr.bf16.mxu0 0
        %1587 = vmatpush1.bf16.msra.mxu0 %v1559
        %1588 = vmatprep.subr.bf16.mxu0 0
        %1589 = vmatpush1.bf16.msra.mxu0 %v1558
        %1590 = vmatprep.subr.bf16.mxu0 0
        %1591 = vmatpush2.bf16.msra.mxu0 0
        %1592 = vmatprep.subr.bf16.mxu0 0
        %1593 = vmatpush2.bf16.msra.mxu0 0
        %1594 = vmatprep.subr.bf16.mxu0 0
        %1595 = vmatpush2.bf16.msra.mxu0 0
        %1596 = vmatprep.subr.bf16.mxu0 0
        %1597 = vmatpush2.bf16.msra.mxu0 0
        %1598 = vmatprep.subr.bf16.mxu0 0
        %1599 = vmatpush2.bf16.msra.mxu0 0
        %1600 = vmatprep.subr.bf16.mxu0 0
        %1601 = vmatpush2.bf16.msra.mxu0 0
        %1602 = vmatprep.subr.bf16.mxu0 0
        %1603 = vmatpush2.bf16.msra.mxu0 0
        %1604 = vmatprep.subr.bf16.mxu0 0
        %1605 = vmatpush2.bf16.msra.mxu0 0
        %1606 = vmatprep.mubr.bf16.mxu0 0
        %1607 = vmatmul.mubr.bf16.gmra.mxu0 %v1524
        %v1608 = vpop.f32.mrf.mxu0
        %v1609 = vadd.f32 %v1399, %v1608
        %v1610 = vpop.f32.mrf.mxu0
        %v1611 = vpop.f32.mrf.mxu0
        %v1612 = vadd.f32 %v1399, %v1611
        %v1613 = vpop.f32.mrf.mxu0
        %1614 = vdwg.mxu0
        %v1617 = vcombine.high %v1484, %v1484
        %v1619 = vunpack.c.l.s4 1966171168
        %v1620 = vunpack.c.0.s8 %v1619
        %v1621 = vlaneseq
        %v1622 = vshrl.u32 %v1621, 7
        %v1623 = vsub.s32 %v1620, %v1622
        %v1624 = vrot.slane %v1484, %v1623
        %v1626 = vunpack.c.l.s4 1966171168
        %v1627 = vunpack.c.0.s8 %v1626
        %v1628 = vlaneseq
        %v1629 = vshrl.u32 %v1628, 7
        %v1630 = vsub.s32 %v1627, %v1629
        %v1631 = vrot.slane %v1617, %v1630
        %v1632 = vcombine.high %v1624, %v1624
        %v1633 = vcombine.high %v1631, %v1631
        %v1635 = vunpack.c.l.s4 1966171168
        %v1636 = vunpack.c.0.s8 %v1635
        %v1637 = vlaneseq
        %v1638 = vshrl.u32 %v1637, 7
        %v1639 = vsub.s32 %v1636, %v1638
        %v1640 = vrot.slane %v1624, %v1639
        %v1642 = vunpack.c.l.s4 1966171168
        %v1643 = vunpack.c.0.s8 %v1642
        %v1644 = vlaneseq
        %v1645 = vshrl.u32 %v1644, 7
        %v1646 = vsub.s32 %v1643, %v1645
        %v1647 = vrot.slane %v1631, %v1646
        %v1649 = vunpack.c.l.s4 1966171168
        %v1650 = vunpack.c.0.s8 %v1649
        %v1651 = vlaneseq
        %v1652 = vshrl.u32 %v1651, 7
        %v1653 = vsub.s32 %v1650, %v1652
        %v1654 = vrot.slane %v1632, %v1653
        %v1656 = vunpack.c.l.s4 1966171168
        %v1657 = vunpack.c.0.s8 %v1656
        %v1658 = vlaneseq
        %v1659 = vshrl.u32 %v1658, 7
        %v1660 = vsub.s32 %v1657, %v1659
        %v1661 = vrot.slane %v1633, %v1660
        %v1662 = vcombine.high %v1640, %v1640
        %v1663 = vcombine.high %v1647, %v1647
        %v1664 = vcombine.high %v1654, %v1654
        %v1665 = vcombine.high %v1661, %v1661
        %v1666 = vcombine.high %v1487, %v1487
        %v1668 = vunpack.c.l.s4 1966171168
        %v1669 = vunpack.c.0.s8 %v1668
        %v1670 = vlaneseq
        %v1671 = vshrl.u32 %v1670, 7
        %v1672 = vsub.s32 %v1669, %v1671
        %v1673 = vrot.slane %v1487, %v1672
        %v1675 = vunpack.c.l.s4 1966171168
        %v1676 = vunpack.c.0.s8 %v1675
        %v1677 = vlaneseq
        %v1678 = vshrl.u32 %v1677, 7
        %v1679 = vsub.s32 %v1676, %v1678
        %v1680 = vrot.slane %v1666, %v1679
        %v1681 = vcombine.high %v1673, %v1673
        %v1682 = vcombine.high %v1680, %v1680
        %v1684 = vunpack.c.l.s4 1966171168
        %v1685 = vunpack.c.0.s8 %v1684
        %v1686 = vlaneseq
        %v1687 = vshrl.u32 %v1686, 7
        %v1688 = vsub.s32 %v1685, %v1687
        %v1689 = vrot.slane %v1673, %v1688
        %v1691 = vunpack.c.l.s4 1966171168
        %v1692 = vunpack.c.0.s8 %v1691
        %v1693 = vlaneseq
        %v1694 = vshrl.u32 %v1693, 7
        %v1695 = vsub.s32 %v1692, %v1694
        %v1696 = vrot.slane %v1680, %v1695
        %v1698 = vunpack.c.l.s4 1966171168
        %v1699 = vunpack.c.0.s8 %v1698
        %v1700 = vlaneseq
        %v1701 = vshrl.u32 %v1700, 7
        %v1702 = vsub.s32 %v1699, %v1701
        %v1703 = vrot.slane %v1681, %v1702
        %v1705 = vunpack.c.l.s4 1966171168
        %v1706 = vunpack.c.0.s8 %v1705
        %v1707 = vlaneseq
        %v1708 = vshrl.u32 %v1707, 7
        %v1709 = vsub.s32 %v1706, %v1708
        %v1710 = vrot.slane %v1682, %v1709
        %v1711 = vcombine.high %v1689, %v1689
        %v1712 = vcombine.high %v1696, %v1696
        %v1713 = vcombine.high %v1703, %v1703
        %v1714 = vcombine.high %v1710, %v1710
        %v1733 = vcombine.high %v1609, %v1609
        %v1735 = vunpack.c.l.s4 1966171168
        %v1736 = vunpack.c.0.s8 %v1735
        %v1737 = vlaneseq
        %v1738 = vshrl.u32 %v1737, 7
        %v1739 = vsub.s32 %v1736, %v1738
        %v1740 = vrot.slane %v1609, %v1739
        %v1742 = vunpack.c.l.s4 1966171168
        %v1743 = vunpack.c.0.s8 %v1742
        %v1744 = vlaneseq
        %v1745 = vshrl.u32 %v1744, 7
        %v1746 = vsub.s32 %v1743, %v1745
        %v1747 = vrot.slane %v1733, %v1746
        %v1748 = vcombine.high %v1740, %v1740
        %v1749 = vcombine.high %v1747, %v1747
        %v1751 = vunpack.c.l.s4 1966171168
        %v1752 = vunpack.c.0.s8 %v1751
        %v1753 = vlaneseq
        %v1754 = vshrl.u32 %v1753, 7
        %v1755 = vsub.s32 %v1752, %v1754
        %v1756 = vrot.slane %v1740, %v1755
        %v1758 = vunpack.c.l.s4 1966171168
        %v1759 = vunpack.c.0.s8 %v1758
        %v1760 = vlaneseq
        %v1761 = vshrl.u32 %v1760, 7
        %v1762 = vsub.s32 %v1759, %v1761
        %v1763 = vrot.slane %v1747, %v1762
        %v1765 = vunpack.c.l.s4 1966171168
        %v1766 = vunpack.c.0.s8 %v1765
        %v1767 = vlaneseq
        %v1768 = vshrl.u32 %v1767, 7
        %v1769 = vsub.s32 %v1766, %v1768
        %v1770 = vrot.slane %v1748, %v1769
        %v1772 = vunpack.c.l.s4 1966171168
        %v1773 = vunpack.c.0.s8 %v1772
        %v1774 = vlaneseq
        %v1775 = vshrl.u32 %v1774, 7
        %v1776 = vsub.s32 %v1773, %v1775
        %v1777 = vrot.slane %v1749, %v1776
        %v1778 = vcombine.high %v1756, %v1756
        %v1779 = vcombine.high %v1763, %v1763
        %v1780 = vcombine.high %v1770, %v1770
        %v1781 = vcombine.high %v1777, %v1777
        %v1782 = vcombine.high %v1612, %v1612
        %v1784 = vunpack.c.l.s4 1966171168
        %v1785 = vunpack.c.0.s8 %v1784
        %v1786 = vlaneseq
        %v1787 = vshrl.u32 %v1786, 7
        %v1788 = vsub.s32 %v1785, %v1787
        %v1789 = vrot.slane %v1612, %v1788
        %v1791 = vunpack.c.l.s4 1966171168
        %v1792 = vunpack.c.0.s8 %v1791
        %v1793 = vlaneseq
        %v1794 = vshrl.u32 %v1793, 7
        %v1795 = vsub.s32 %v1792, %v1794
        %v1796 = vrot.slane %v1782, %v1795
        %v1797 = vcombine.high %v1789, %v1789
        %v1798 = vcombine.high %v1796, %v1796
        %v1800 = vunpack.c.l.s4 1966171168
        %v1801 = vunpack.c.0.s8 %v1800
        %v1802 = vlaneseq
        %v1803 = vshrl.u32 %v1802, 7
        %v1804 = vsub.s32 %v1801, %v1803
        %v1805 = vrot.slane %v1789, %v1804
        %v1807 = vunpack.c.l.s4 1966171168
        %v1808 = vunpack.c.0.s8 %v1807
        %v1809 = vlaneseq
        %v1810 = vshrl.u32 %v1809, 7
        %v1811 = vsub.s32 %v1808, %v1810
        %v1812 = vrot.slane %v1796, %v1811
        %v1814 = vunpack.c.l.s4 1966171168
        %v1815 = vunpack.c.0.s8 %v1814
        %v1816 = vlaneseq
        %v1817 = vshrl.u32 %v1816, 7
        %v1818 = vsub.s32 %v1815, %v1817
        %v1819 = vrot.slane %v1797, %v1818
        %v1821 = vunpack.c.l.s4 1966171168
        %v1822 = vunpack.c.0.s8 %v1821
        %v1823 = vlaneseq
        %v1824 = vshrl.u32 %v1823, 7
        %v1825 = vsub.s32 %v1822, %v1824
        %v1826 = vrot.slane %v1798, %v1825
        %v1827 = vcombine.high %v1805, %v1805
        %v1828 = vcombine.high %v1812, %v1812
        %v1829 = vcombine.high %v1819, %v1819
        %v1830 = vcombine.high %v1826, %v1826
        %v1831 = vlaneseq
        %v1832 = vshrl.u32 %v1831, 7
        %v1833 = vsub.s32 0, %v1832
        %v1834 = vrot.slane %v1756, %v1833
        %v1835 = vlaneseq
        %v1836 = vshrl.u32 %v1835, 7
        %v1837 = vsub.s32 0, %v1836
        %v1838 = vrot.slane %v1770, %v1837
        %v1839 = vlaneseq
        %v1840 = vshrl.u32 %v1839, 7
        %v1841 = vsub.s32 0, %v1840
        %v1842 = vrot.slane %v1778, %v1841
        %v1843 = vlaneseq
        %v1844 = vshrl.u32 %v1843, 7
        %v1845 = vsub.s32 0, %v1844
        %v1846 = vrot.slane %v1780, %v1845
        %v1847 = vlaneseq
        %v1848 = vshrl.u32 %v1847, 7
        %v1849 = vsub.s32 0, %v1848
        %v1850 = vrot.slane %v1763, %v1849
        %v1851 = vlaneseq
        %v1852 = vshrl.u32 %v1851, 7
        %v1853 = vsub.s32 0, %v1852
        %v1854 = vrot.slane %v1777, %v1853
        %v1855 = vlaneseq
        %v1856 = vshrl.u32 %v1855, 7
        %v1857 = vsub.s32 0, %v1856
        %v1858 = vrot.slane %v1779, %v1857
        %v1859 = vlaneseq
        %v1860 = vshrl.u32 %v1859, 7
        %v1861 = vsub.s32 0, %v1860
        %v1862 = vrot.slane %v1781, %v1861
        %v1863 = vlaneseq
        %v1864 = vshrl.u32 %v1863, 7
        %v1865 = vsub.s32 0, %v1864
        %v1866 = vrot.slane %v1805, %v1865
        %v1867 = vlaneseq
        %v1868 = vshrl.u32 %v1867, 7
        %v1869 = vsub.s32 0, %v1868
        %v1870 = vrot.slane %v1819, %v1869
        %v1871 = vlaneseq
        %v1872 = vshrl.u32 %v1871, 7
        %v1873 = vsub.s32 0, %v1872
        %v1874 = vrot.slane %v1827, %v1873
        %v1875 = vlaneseq
        %v1876 = vshrl.u32 %v1875, 7
        %v1877 = vsub.s32 0, %v1876
        %v1878 = vrot.slane %v1829, %v1877
        %v1879 = vlaneseq
        %v1880 = vshrl.u32 %v1879, 7
        %v1881 = vsub.s32 0, %v1880
        %v1882 = vrot.slane %v1812, %v1881
        %v1883 = vlaneseq
        %v1884 = vshrl.u32 %v1883, 7
        %v1885 = vsub.s32 0, %v1884
        %v1886 = vrot.slane %v1826, %v1885
        %v1887 = vlaneseq
        %v1888 = vshrl.u32 %v1887, 7
        %v1889 = vsub.s32 0, %v1888
        %v1890 = vrot.slane %v1828, %v1889
        %v1891 = vlaneseq
        %v1892 = vshrl.u32 %v1891, 7
        %v1893 = vsub.s32 0, %v1892
        %v1894 = vrot.slane %v1830, %v1893
        %v1911 = vsel %vm555, %v1640, %v1834
        %v1912 = vsel %vm555, %v1654, %v1838
        %v1913 = vsel %vm555, %v1662, %v1842
        %v1914 = vsel %vm555, %v1664, %v1846
        %v1915 = vsel %vm555, %v1647, %v1850
        %v1916 = vsel %vm555, %v1661, %v1854
        %v1917 = vsel %vm555, %v1663, %v1858
        %v1918 = vsel %vm555, %v1665, %v1862
        %v1919 = vsel %vm555, %v1689, %v1866
        %v1920 = vsel %vm555, %v1703, %v1870
        %v1921 = vsel %vm555, %v1711, %v1874
        %v1922 = vsel %vm555, %v1713, %v1878
        %v1923 = vsel %vm555, %v1696, %v1882
        %v1924 = vsel %vm555, %v1710, %v1886
        %v1925 = vsel %vm555, %v1712, %v1890
        %v1926 = vsel %vm555, %v1714, %v1894
        %v1927 = vxor.u32 %v1911, 2147483648
        %v1928 = vxor.u32 %v1912, 2147483648
        %v1929 = vxor.u32 %v1913, 2147483648
        %v1930 = vxor.u32 %v1914, 2147483648
        %v1931 = vxor.u32 %v1915, 2147483648
        %v1932 = vxor.u32 %v1916, 2147483648
        %v1933 = vxor.u32 %v1917, 2147483648
        %v1934 = vxor.u32 %v1918, 2147483648
        %v1935 = vxor.u32 %v1919, 2147483648
        %v1936 = vxor.u32 %v1920, 2147483648
        %v1937 = vxor.u32 %v1921, 2147483648
        %v1938 = vxor.u32 %v1922, 2147483648
        %v1939 = vxor.u32 %v1923, 2147483648
        %v1940 = vxor.u32 %v1924, 2147483648
        %v1941 = vxor.u32 %v1925, 2147483648
        %v1942 = vxor.u32 %v1926, 2147483648
        %v1943 = vmul.f32 %v1927, 1.442695
        %v1944 = vpow.pop %v1943
        %v1945 = vmul.f32 %v1928, 1.442695
        %v1946 = vpow.pop %v1945
        %v1947 = vmul.f32 %v1929, 1.442695
        %v1948 = vpow.pop %v1947
        %v1949 = vmul.f32 %v1930, 1.442695
        %v1950 = vpow.pop %v1949
        %v1951 = vmul.f32 %v1931, 1.442695
        %v1952 = vpow.pop %v1951
        %v1953 = vmul.f32 %v1932, 1.442695
        %v1954 = vpow.pop %v1953
        %v1955 = vmul.f32 %v1933, 1.442695
        %v1956 = vpow.pop %v1955
        %v1957 = vmul.f32 %v1934, 1.442695
        %v1958 = vpow.pop %v1957
        %v1959 = vmul.f32 %v1935, 1.442695
        %v1960 = vpow.pop %v1959
        %v1961 = vmul.f32 %v1936, 1.442695
        %v1962 = vpow.pop %v1961
        %v1963 = vmul.f32 %v1937, 1.442695
        %v1964 = vpow.pop %v1963
        %v1965 = vmul.f32 %v1938, 1.442695
        %v1966 = vpow.pop %v1965
        %v1967 = vmul.f32 %v1939, 1.442695
        %v1968 = vpow.pop %v1967
        %v1969 = vmul.f32 %v1940, 1.442695
        %v1970 = vpow.pop %v1969
        %v1971 = vmul.f32 %v1941, 1.442695
        %v1972 = vpow.pop %v1971
        %v1973 = vmul.f32 %v1942, 1.442695
        %v1974 = vpow.pop %v1973
        %v1975 = vadd.f32 %v1944, 1.0
        %v1976 = vadd.f32 %v1946, 1.0
        %v1977 = vadd.f32 %v1948, 1.0
        %v1978 = vadd.f32 %v1950, 1.0
        %v1979 = vadd.f32 %v1952, 1.0
        %v1980 = vadd.f32 %v1954, 1.0
        %v1981 = vadd.f32 %v1956, 1.0
        %v1982 = vadd.f32 %v1958, 1.0
        %v1983 = vadd.f32 %v1960, 1.0
        %v1984 = vadd.f32 %v1962, 1.0
        %v1985 = vadd.f32 %v1964, 1.0
        %v1986 = vadd.f32 %v1966, 1.0
        %v1987 = vadd.f32 %v1968, 1.0
        %v1988 = vadd.f32 %v1970, 1.0
        %v1989 = vadd.f32 %v1972, 1.0
        %v1990 = vadd.f32 %v1974, 1.0
        %v1991 = vrcp.pop %v1975
        %v1992 = vmul.f32 1.0, %v1991
        %v1993 = vrcp.pop %v1976
        %v1994 = vmul.f32 1.0, %v1993
        %v1995 = vrcp.pop %v1977
        %v1996 = vmul.f32 1.0, %v1995
        %v1997 = vrcp.pop %v1978
        %v1998 = vmul.f32 1.0, %v1997
        %v1999 = vrcp.pop %v1979
        %v2000 = vmul.f32 1.0, %v1999
        %v2001 = vrcp.pop %v1980
        %v2002 = vmul.f32 1.0, %v2001
        %v2003 = vrcp.pop %v1981
        %v2004 = vmul.f32 1.0, %v2003
        %v2005 = vrcp.pop %v1982
        %v2006 = vmul.f32 1.0, %v2005
        %v2007 = vrcp.pop %v1983
        %v2008 = vmul.f32 1.0, %v2007
        %v2009 = vrcp.pop %v1984
        %v2010 = vmul.f32 1.0, %v2009
        %v2011 = vrcp.pop %v1985
        %v2012 = vmul.f32 1.0, %v2011
        %v2013 = vrcp.pop %v1986
        %v2014 = vmul.f32 1.0, %v2013
        %v2015 = vrcp.pop %v1987
        %v2016 = vmul.f32 1.0, %v2015
        %v2017 = vrcp.pop %v1988
        %v2018 = vmul.f32 1.0, %v2017
        %v2019 = vrcp.pop %v1989
        %v2020 = vmul.f32 1.0, %v2019
        %v2021 = vrcp.pop %v1990
        %v2022 = vmul.f32 1.0, %v2021
        %v2039 = vcombine.low %v1992, %v1994
        %v2040 = vcombine.low %v1996, %v1998
        %v2042 = vunpack.c.l.s4 1983009808
        %v2043 = vunpack.c.0.s8 %v2042
        %v2044 = vlaneseq
        %v2045 = vshrl.u32 %v2044, 7
        %v2046 = vsub.s32 %v2043, %v2045
        %v2047 = vrot.slane %v2039, %v2046
        %v2049 = vunpack.c.l.s4 1983009808
        %v2050 = vunpack.c.0.s8 %v2049
        %v2051 = vlaneseq
        %v2052 = vshrl.u32 %v2051, 7
        %v2053 = vsub.s32 %v2050, %v2052
        %v2054 = vrot.slane %v2040, %v2053
        %v2055 = vcombine.low %v2047, %v2054
        %v2056 = vcombine.low %v2000, %v2002
        %v2057 = vcombine.low %v2004, %v2006
        %v2059 = vunpack.c.l.s4 1983009808
        %v2060 = vunpack.c.0.s8 %v2059
        %v2061 = vlaneseq
        %v2062 = vshrl.u32 %v2061, 7
        %v2063 = vsub.s32 %v2060, %v2062
        %v2064 = vrot.slane %v2056, %v2063
        %v2066 = vunpack.c.l.s4 1983009808
        %v2067 = vunpack.c.0.s8 %v2066
        %v2068 = vlaneseq
        %v2069 = vshrl.u32 %v2068, 7
        %v2070 = vsub.s32 %v2067, %v2069
        %v2071 = vrot.slane %v2057, %v2070
        %v2072 = vcombine.low %v2064, %v2071
        %v2073 = vcombine.low %v2008, %v2010
        %v2074 = vcombine.low %v2012, %v2014
        %v2076 = vunpack.c.l.s4 1983009808
        %v2077 = vunpack.c.0.s8 %v2076
        %v2078 = vlaneseq
        %v2079 = vshrl.u32 %v2078, 7
        %v2080 = vsub.s32 %v2077, %v2079
        %v2081 = vrot.slane %v2073, %v2080
        %v2083 = vunpack.c.l.s4 1983009808
        %v2084 = vunpack.c.0.s8 %v2083
        %v2085 = vlaneseq
        %v2086 = vshrl.u32 %v2085, 7
        %v2087 = vsub.s32 %v2084, %v2086
        %v2088 = vrot.slane %v2074, %v2087
        %v2089 = vcombine.low %v2081, %v2088
        %v2090 = vcombine.low %v2016, %v2018
        %v2091 = vcombine.low %v2020, %v2022
        %v2093 = vunpack.c.l.s4 1983009808
        %v2094 = vunpack.c.0.s8 %v2093
        %v2095 = vlaneseq
        %v2096 = vshrl.u32 %v2095, 7
        %v2097 = vsub.s32 %v2094, %v2096
        %v2098 = vrot.slane %v2090, %v2097
        %v2100 = vunpack.c.l.s4 1983009808
        %v2101 = vunpack.c.0.s8 %v2100
        %v2102 = vlaneseq
        %v2103 = vshrl.u32 %v2102, 7
        %v2104 = vsub.s32 %v2101, %v2103
        %v2105 = vrot.slane %v2091, %v2104
        %v2106 = vcombine.low %v2098, %v2105
        %2111 = vst.msk [vmem:[%s310] sm:$0xff] %vm331, %v2055
        %2112 = vst.msk [vmem:[%s310 + $0x8] sm:$0xff] %vm331, %v2072
        %2113 = vst.msk [vmem:[%s310 + $0x10] sm:$0xff] %vm331, %v2089
        %2114 = vst.msk [vmem:[%s310 + $0x18] sm:$0xff] %vm331, %v2106
        %s2115 = sand.u32 %s220, 1
        %s2116 = scalar_lea.sflag [#allocation3], %s2115
        %s2117 = sand.u32 %s220, 1
        %s2118 = smul.addr %s2117, 32
        %s2119 = scalar_lea.vmem [#allocation2], %s2118
        // Predicated region
        $region57: #{decoder_forward.1} parent=55 // pred_check
          %p2120 = pneg %p230
        $region58: #{decoder_forward.1} parent=55 // pred_check_branch
          %2122 = sbr.rel (%p2120) target = $region60
        $region59: #{decoder_forward.1} parent=55 // pred_region
          %s2124 = ssub.s32 512, 512
          %2125 = vsyncadd %s2116, %s2124
          %s2126 = smul.addr %s23, 4
          %s2127 = smul.addr %s2126, 128
          %s2128 = scalar_lea.hbm %s9, %s2127
          %s2129 = sshll.u32 %s2119, 4
          %s2130 = int_to_ptr.vmem [resolvable:$true] %s2129
          %2135 = dma.vmem_to_hbm [thread:$0]  %s2130, 512, %s2128, %s2116, 128, 128, 8
        $region60: #{decoder_forward.1} parent=55 // pred_fallthru
          _
      $region56: #{decoder_forward.1} parent=5 // pred_fallthru
        _
      %p2136 = scmp.le.s32.totalorder 2, %s18
      // Predicated region
      $region61: #{decoder_forward.1} parent=5 // pred_check
        %p2137 = pneg %p2136
      $region62: #{decoder_forward.1} parent=5 // pred_check_branch
        %2139 = sbr.rel (%p2137) target = $region64
      $region63: #{decoder_forward.1} parent=5 // pred_region
        %s2140 = ssub.s32 %s18, 2
        // Predicated region
        $region65: #{decoder_forward.1} parent=63 // pred_check
          %p2141 = pneg %p236
        $region66: #{decoder_forward.1} parent=63 // pred_check_branch
          %2143 = sbr.rel (%p2141) target = $region68
        $region67: #{decoder_forward.1} parent=63 // pred_region
          %s2144 = sand.u32 %s221, 1
          %s2145 = scalar_lea.sflag [#allocation3], %s2144
          %s2146 = sand.u32 %s221, 1
          %s2147 = smul.addr %s2146, 32
          %s2148 = scalar_lea.vmem [#allocation2], %s2147
          %2149 = dma.done %s2145, 512
        $region68: #{decoder_forward.1} parent=63 // pred_fallthru
          _
      $region64: #{decoder_forward.1} parent=5 // pred_fallthru
        _
    $region6: #{decoder_forward.1} parent=1 // loop_footer
      %s22 = sadd.s32 1, %s18
    $region7: #{decoder_forward.1} parent=1 // loop_footer_branch
      %17 = sbr.rel target = $region3
    $region8: #{decoder_forward.1} parent=1 // loop_exit
      _
    %2150 = vsyncpa [#allocation3], 1
    %s2151 = scalar_lea.sflag [#allocation3], 1
    %2152 = vsyncpa %s2151, 1

</llo_original>
